<compile_context>
chip_gen: v7x
topology: tpu7x:2x2x1
jax: 0.10.0
libtpu: 0.0.40
codegen_flags: <defaults>
</compile_context>

<pallas_src>
import jax
import jax.numpy as jnp
import numpy as np
from jax import lax
from jax.experimental import pallas as pl
from jax.experimental.pallas import tpu as pltpu

LANE_CHUNK = 256      # samples (lanes) per register-resident inner step
FEAT = 3 * 8 * 8      # 192 input features per sample (C*H*W)


def net_kernel(x_ref, cw_ref, cb_ref, fw_ref, fb_ref, out_ref):
    # x_ref : VMEM [TB, 192] f32   (samples on sublanes, natural NCHW flatten)
    # cw_ref: SMEM [27] f32        (conv weight, (c, kh, kw) flattened)
    # cb_ref: SMEM [1]  f32        (conv bias)
    # fw_ref: SMEM [18] f32        (fc weight, (in, out) flattened: idx = 2*k + o)
    # fb_ref: SMEM [2]  f32        (fc bias)
    # out_ref: VMEM [2, TB] f32    (lane-dense output, transposed back in wrapper)
    TB = x_ref.shape[0]
    CH = LANE_CHUNK
    n_chunks = TB // CH
    OH = OW = 6

    def chunk(i, carry):
        base = pl.multiple_of(i * CH, CH)

        # [CH, 192] -> [192, CH]: batch onto lanes (small XLU transpose, ~0.2
        # ops/sample) so every conv tap is a dense 128-lane VPU MAC.
        xt = jnp.transpose(x_ref[pl.ds(base, CH), :])        # [192, CH]
        x4 = xt.reshape(3, 8, 8, CH)                         # free re-view (c,h,w,lane)

        # ---- conv2d(3->1, k=3): 27 scalar-broadcast MACs into a vreg-resident
        # [6, 6, CH] accumulator.  kw (sublane) slice is hoisted out of the kh
        # loop so shifted slabs are shared/CSE'd across kh.
        acc = None
        for c in range(3):
            for kw in range(3):
                xk = x4[c, :, kw:kw + OW, :]                  # [8, 6, CH]
                for kh in range(3):
                    w = cw_ref[c * 9 + kh * 3 + kw]           # scalar from SMEM
                    tap = xk[kh:kh + OH] * w                  # [6, 6, CH]
                    acc = tap if acc is None else acc + tap

        # ---- 2x2 maxpool, then conv bias + ReLU (uniform bias and monotone
        # ReLU commute with max: 9 adds/maxes instead of 36), fused with fc1+ReLU.
        rows = [jnp.maximum(acc[2 * pi], acc[2 * pi + 1]) for pi in range(3)]  # [6, CH]
        o0 = None
        o1 = None
        for pi in range(3):
            r = rows[pi]
            for pj in range(3):
                v = jnp.maximum(r[2 * pj:2 * pj + 1, :],
                                r[2 * pj + 1:2 * pj + 2, :])   # [1, CH]
                v = jnp.maximum(v + cb_ref[0], 0.0)            # conv bias + ReLU
                k = pi * 3 + pj
                t0 = v * fw_ref[2 * k + 0]
                t1 = v * fw_ref[2 * k + 1]
                o0 = t0 if o0 is None else o0 + t0
                o1 = t1 if o1 is None else o1 + t1

        out_blk = jnp.concatenate(
            [jnp.maximum(o0 + fb_ref[0], 0.0),
             jnp.maximum(o1 + fb_ref[1], 0.0)], axis=0)        # [2, CH] stacked store
        out_ref[:, pl.ds(base, CH)] = out_blk
        return carry

    lax.fori_loop(0, n_chunks, chunk, 0, unroll=True)


def net_forward(x, conv_w, conv_b, fc_w, fc_b):
    """x: [B, 3, 8, 8] NCHW f32; conv_w: [1, 3, 3, 3]; conv_b: [1];
    fc_w: [2, 9]; fc_b: [2]. Returns [B, 2] f32."""
    B = x.shape[0]
    # Contiguous (copy-free) flatten; the batch-last layout change is in-kernel.
    x2 = x.astype(jnp.float32).reshape(B, FEAT)

    # Batch tile: multiple of LANE_CHUNK in [256, 1024], aiming for >=4 grid
    # steps (pipelining + v7x two-TC sharding).  768*TB bytes per block is tiny
    # vs. VMEM on all generations.
    TB = max(LANE_CHUNK, min(1024, ((B // 4) // LANE_CHUNK) * LANE_CHUNK))
    steps = pl.cdiv(B, TB)
    N = steps * TB
    if N != B:                    # pad only the ragged tail (no-op if B % TB == 0)
        x2 = jnp.pad(x2, ((0, N - B), (0, 0)))

    cw = conv_w.reshape(-1).astype(jnp.float32)     # (27,) order (c, kh, kw)
    cb = conv_b.reshape(-1).astype(jnp.float32)     # (1,)
    fw = fc_w.T.reshape(-1).astype(jnp.float32)     # (18,) order (in, out)
    fb = fc_b.reshape(-1).astype(jnp.float32)       # (2,)

    out = pl.pallas_call(
        net_kernel,
        out_shape=jax.ShapeDtypeStruct((2, N), jnp.float32),
        grid=(steps,),
        in_specs=[
            pl.BlockSpec((TB, FEAT), lambda i: (i, 0)),                # x tile (VMEM)
            pl.BlockSpec(memory_space=pltpu.MemorySpace.SMEM),         # conv weight
            pl.BlockSpec(memory_space=pltpu.MemorySpace.SMEM),         # conv bias
            pl.BlockSpec(memory_space=pltpu.MemorySpace.SMEM),         # fc weight
            pl.BlockSpec(memory_space=pltpu.MemorySpace.SMEM),         # fc bias
        ],
        out_specs=pl.BlockSpec((2, TB), lambda i: (0, i)),             # lane-dense out
        compiler_params=pltpu.CompilerParams(
            dimension_semantics=("parallel",),
            vmem_limit_bytes=32 * 1024 * 1024,
        ),
    )(x2, cw, cb, fw, fb)

    return out[:, :B].T                              # back to [B, 2]


def net_ref(x, conv_w, conv_b, fc_w, fc_b):
    """Pure-JAX reference replicating the PyTorch forward."""
    y = lax.conv_general_dilated(
        x, conv_w, window_strides=(1, 1), padding="VALID",
        dimension_numbers=("NCHW", "OIHW", "NCHW"))
    y = jnp.maximum(y + conv_b.reshape(1, -1, 1, 1), 0.0)
    B, C, H, W = y.shape
    y = y.reshape(B, C, H // 2, 2, W // 2, 2).max(axis=(3, 5))   # maxpool 2x2
    y = y.reshape(B, -1)                                         # view(-1, 9)
    return jnp.maximum(y @ fc_w.T + fc_b, 0.0)                   # relu(fc1)


if __name__ == "__main__":
    key = jax.random.PRNGKey(0)
    k_x, k_cw, k_cb, k_fw, k_fb = jax.random.split(key, 5)

    B = 2
    x = jax.random.normal(k_x, (B, 3, 8, 8), dtype=jnp.float32)

    # Deterministic parameter init (uniform, PyTorch-like fan-in bounds).
    conv_bound = 1.0 / np.sqrt(3 * 3 * 3)
    fc_bound = 1.0 / np.sqrt(9.0)
    conv_w = jax.random.uniform(k_cw, (1, 3, 3, 3), jnp.float32, -conv_bound, conv_bound)
    conv_b = jax.random.uniform(k_cb, (1,), jnp.float32, -conv_bound, conv_bound)
    fc_w = jax.random.uniform(k_fw, (2, 9), jnp.float32, -fc_bound, fc_bound)
    fc_b = jax.random.uniform(k_fb, (2,), jnp.float32, -fc_bound, fc_bound)

    fwd = jax.jit(net_forward)
    out = jax.block_until_ready(fwd(x, conv_w, conv_b, fc_w, fc_b))
    ref = jax.block_until_ready(net_ref(x, conv_w, conv_b, fc_w, fc_b))

    assert out.shape == (B, 2), out.shape
    np.testing.assert_allclose(np.asarray(out), np.asarray(ref), rtol=1e-5, atol=1e-5)

    print("KERNEL_OK")
</pallas_src>

<mosaic_0001>
module attributes {stable_mosaic.version = 11 : i64} {
  func.func @net_kernel(%arg0: i32, %arg1: memref<256x192xf32, #tpu.memory_space<vmem>>, %arg2: memref<27xf32, #tpu.memory_space<smem>>, %arg3: memref<1xf32, #tpu.memory_space<smem>>, %arg4: memref<18xf32, #tpu.memory_space<smem>>, %arg5: memref<2xf32, #tpu.memory_space<smem>>, %arg6: memref<2x256xf32, #tpu.memory_space<vmem>>) attributes {dimension_semantics = [#tpu.dimension_semantics<parallel>], iteration_bounds = array<i64: 1>, scalar_prefetch = 0 : i64, scratch_operands = 0 : i64, tpu.core_type = #tpu.core_type<tc>, window_params = [{transform_indices = @transform_0, window_bounds = array<i64: 256, 192>}, {transform_indices = @transform_1, window_bounds = array<i64: 27>}, {transform_indices = @transform_2, window_bounds = array<i64: 1>}, {transform_indices = @transform_3, window_bounds = array<i64: 18>}, {transform_indices = @transform_4, window_bounds = array<i64: 2>}, {transform_indices = @transform_5, window_bounds = array<i64: 2, 256>}]} {
    %c0_i32 = arith.constant 0 : i32
    %c256_i32 = arith.constant 256 : i32
    %0 = arith.muli %c0_i32, %c256_i32 : i32
    %1 = tpu.assume_multiple %0, 256 : i32
    %2 = arith.index_cast %1 : i32 to index
    %c0 = arith.constant 0 : index
    %3 = vector.load %arg1[%2, %c0] : memref<256x192xf32, #tpu.memory_space<vmem>>, vector<256x192xf32>
    %4 = tpu.transpose %3, [1, 0] : vector<256x192xf32> -> vector<192x256xf32>
    %5 = vector.shape_cast %4 : vector<192x256xf32> to vector<3x8x8x256xf32>
    %6 = vector.extract_strided_slice %5 {offsets = [0, 0, 0, 0], sizes = [1, 8, 6, 256], strides = [1, 1, 1, 1]} : vector<3x8x8x256xf32> to vector<1x8x6x256xf32>
    %7 = vector.shape_cast %6 : vector<1x8x6x256xf32> to vector<8x6x256xf32>
    %c0_0 = arith.constant 0 : index
    %8 = memref.load %arg2[%c0_0] : memref<27xf32, #tpu.memory_space<smem>>
    %9 = vector.extract_strided_slice %7 {offsets = [0, 0, 0], sizes = [6, 6, 256], strides = [1, 1, 1]} : vector<8x6x256xf32> to vector<6x6x256xf32>
    %10 = vector.broadcast %8 : f32 to vector<6x6x256xf32>
    %11 = arith.mulf %9, %10 : vector<6x6x256xf32>
    %c3 = arith.constant 3 : index
    %12 = memref.load %arg2[%c3] : memref<27xf32, #tpu.memory_space<smem>>
    %13 = vector.extract_strided_slice %7 {offsets = [1, 0, 0], sizes = [6, 6, 256], strides = [1, 1, 1]} : vector<8x6x256xf32> to vector<6x6x256xf32>
    %14 = vector.broadcast %12 : f32 to vector<6x6x256xf32>
    %15 = arith.mulf %13, %14 : vector<6x6x256xf32>
    %16 = arith.addf %11, %15 : vector<6x6x256xf32>
    %c6 = arith.constant 6 : index
    %17 = memref.load %arg2[%c6] : memref<27xf32, #tpu.memory_space<smem>>
    %18 = vector.extract_strided_slice %7 {offsets = [2, 0, 0], sizes = [6, 6, 256], strides = [1, 1, 1]} : vector<8x6x256xf32> to vector<6x6x256xf32>
    %19 = vector.broadcast %17 : f32 to vector<6x6x256xf32>
    %20 = arith.mulf %18, %19 : vector<6x6x256xf32>
    %21 = arith.addf %16, %20 : vector<6x6x256xf32>
    %22 = vector.extract_strided_slice %5 {offsets = [0, 0, 1, 0], sizes = [1, 8, 6, 256], strides = [1, 1, 1, 1]} : vector<3x8x8x256xf32> to vector<1x8x6x256xf32>
    %23 = vector.shape_cast %22 : vector<1x8x6x256xf32> to vector<8x6x256xf32>
    %c1 = arith.constant 1 : index
    %24 = memref.load %arg2[%c1] : memref<27xf32, #tpu.memory_space<smem>>
    %25 = vector.extract_strided_slice %23 {offsets = [0, 0, 0], sizes = [6, 6, 256], strides = [1, 1, 1]} : vector<8x6x256xf32> to vector<6x6x256xf32>
    %26 = vector.broadcast %24 : f32 to vector<6x6x256xf32>
    %27 = arith.mulf %25, %26 : vector<6x6x256xf32>
    %28 = arith.addf %21, %27 : vector<6x6x256xf32>
    %c4 = arith.constant 4 : index
    %29 = memref.load %arg2[%c4] : memref<27xf32, #tpu.memory_space<smem>>
    %30 = vector.extract_strided_slice %23 {offsets = [1, 0, 0], sizes = [6, 6, 256], strides = [1, 1, 1]} : vector<8x6x256xf32> to vector<6x6x256xf32>
    %31 = vector.broadcast %29 : f32 to vector<6x6x256xf32>
    %32 = arith.mulf %30, %31 : vector<6x6x256xf32>
    %33 = arith.addf %28, %32 : vector<6x6x256xf32>
    %c7 = arith.constant 7 : index
    %34 = memref.load %arg2[%c7] : memref<27xf32, #tpu.memory_space<smem>>
    %35 = vector.extract_strided_slice %23 {offsets = [2, 0, 0], sizes = [6, 6, 256], strides = [1, 1, 1]} : vector<8x6x256xf32> to vector<6x6x256xf32>
    %36 = vector.broadcast %34 : f32 to vector<6x6x256xf32>
    %37 = arith.mulf %35, %36 : vector<6x6x256xf32>
    %38 = arith.addf %33, %37 : vector<6x6x256xf32>
    %39 = vector.extract_strided_slice %5 {offsets = [0, 0, 2, 0], sizes = [1, 8, 6, 256], strides = [1, 1, 1, 1]} : vector<3x8x8x256xf32> to vector<1x8x6x256xf32>
    %40 = vector.shape_cast %39 : vector<1x8x6x256xf32> to vector<8x6x256xf32>
    %c2 = arith.constant 2 : index
    %41 = memref.load %arg2[%c2] : memref<27xf32, #tpu.memory_space<smem>>
    %42 = vector.extract_strided_slice %40 {offsets = [0, 0, 0], sizes = [6, 6, 256], strides = [1, 1, 1]} : vector<8x6x256xf32> to vector<6x6x256xf32>
    %43 = vector.broadcast %41 : f32 to vector<6x6x256xf32>
    %44 = arith.mulf %42, %43 : vector<6x6x256xf32>
    %45 = arith.addf %38, %44 : vector<6x6x256xf32>
    %c5 = arith.constant 5 : index
    %46 = memref.load %arg2[%c5] : memref<27xf32, #tpu.memory_space<smem>>
    %47 = vector.extract_strided_slice %40 {offsets = [1, 0, 0], sizes = [6, 6, 256], strides = [1, 1, 1]} : vector<8x6x256xf32> to vector<6x6x256xf32>
    %48 = vector.broadcast %46 : f32 to vector<6x6x256xf32>
    %49 = arith.mulf %47, %48 : vector<6x6x256xf32>
    %50 = arith.addf %45, %49 : vector<6x6x256xf32>
    %c8 = arith.constant 8 : index
    %51 = memref.load %arg2[%c8] : memref<27xf32, #tpu.memory_space<smem>>
    %52 = vector.extract_strided_slice %40 {offsets = [2, 0, 0], sizes = [6, 6, 256], strides = [1, 1, 1]} : vector<8x6x256xf32> to vector<6x6x256xf32>
    %53 = vector.broadcast %51 : f32 to vector<6x6x256xf32>
    %54 = arith.mulf %52, %53 : vector<6x6x256xf32>
    %55 = arith.addf %50, %54 : vector<6x6x256xf32>
    %56 = vector.extract_strided_slice %5 {offsets = [1, 0, 0, 0], sizes = [1, 8, 6, 256], strides = [1, 1, 1, 1]} : vector<3x8x8x256xf32> to vector<1x8x6x256xf32>
    %57 = vector.shape_cast %56 : vector<1x8x6x256xf32> to vector<8x6x256xf32>
    %c9 = arith.constant 9 : index
    %58 = memref.load %arg2[%c9] : memref<27xf32, #tpu.memory_space<smem>>
    %59 = vector.extract_strided_slice %57 {offsets = [0, 0, 0], sizes = [6, 6, 256], strides = [1, 1, 1]} : vector<8x6x256xf32> to vector<6x6x256xf32>
    %60 = vector.broadcast %58 : f32 to vector<6x6x256xf32>
    %61 = arith.mulf %59, %60 : vector<6x6x256xf32>
    %62 = arith.addf %55, %61 : vector<6x6x256xf32>
    %c12 = arith.constant 12 : index
    %63 = memref.load %arg2[%c12] : memref<27xf32, #tpu.memory_space<smem>>
    %64 = vector.extract_strided_slice %57 {offsets = [1, 0, 0], sizes = [6, 6, 256], strides = [1, 1, 1]} : vector<8x6x256xf32> to vector<6x6x256xf32>
    %65 = vector.broadcast %63 : f32 to vector<6x6x256xf32>
    %66 = arith.mulf %64, %65 : vector<6x6x256xf32>
    %67 = arith.addf %62, %66 : vector<6x6x256xf32>
    %c15 = arith.constant 15 : index
    %68 = memref.load %arg2[%c15] : memref<27xf32, #tpu.memory_space<smem>>
    %69 = vector.extract_strided_slice %57 {offsets = [2, 0, 0], sizes = [6, 6, 256], strides = [1, 1, 1]} : vector<8x6x256xf32> to vector<6x6x256xf32>
    %70 = vector.broadcast %68 : f32 to vector<6x6x256xf32>
    %71 = arith.mulf %69, %70 : vector<6x6x256xf32>
    %72 = arith.addf %67, %71 : vector<6x6x256xf32>
    %73 = vector.extract_strided_slice %5 {offsets = [1, 0, 1, 0], sizes = [1, 8, 6, 256], strides = [1, 1, 1, 1]} : vector<3x8x8x256xf32> to vector<1x8x6x256xf32>
    %74 = vector.shape_cast %73 : vector<1x8x6x256xf32> to vector<8x6x256xf32>
    %c10 = arith.constant 10 : index
    %75 = memref.load %arg2[%c10] : memref<27xf32, #tpu.memory_space<smem>>
    %76 = vector.extract_strided_slice %74 {offsets = [0, 0, 0], sizes = [6, 6, 256], strides = [1, 1, 1]} : vector<8x6x256xf32> to vector<6x6x256xf32>
    %77 = vector.broadcast %75 : f32 to vector<6x6x256xf32>
    %78 = arith.mulf %76, %77 : vector<6x6x256xf32>
    %79 = arith.addf %72, %78 : vector<6x6x256xf32>
    %c13 = arith.constant 13 : index
    %80 = memref.load %arg2[%c13] : memref<27xf32, #tpu.memory_space<smem>>
    %81 = vector.extract_strided_slice %74 {offsets = [1, 0, 0], sizes = [6, 6, 256], strides = [1, 1, 1]} : vector<8x6x256xf32> to vector<6x6x256xf32>
    %82 = vector.broadcast %80 : f32 to vector<6x6x256xf32>
    %83 = arith.mulf %81, %82 : vector<6x6x256xf32>
    %84 = arith.addf %79, %83 : vector<6x6x256xf32>
    %c16 = arith.constant 16 : index
    %85 = memref.load %arg2[%c16] : memref<27xf32, #tpu.memory_space<smem>>
    %86 = vector.extract_strided_slice %74 {offsets = [2, 0, 0], sizes = [6, 6, 256], strides = [1, 1, 1]} : vector<8x6x256xf32> to vector<6x6x256xf32>
    %87 = vector.broadcast %85 : f32 to vector<6x6x256xf32>
    %88 = arith.mulf %86, %87 : vector<6x6x256xf32>
    %89 = arith.addf %84, %88 : vector<6x6x256xf32>
    %90 = vector.extract_strided_slice %5 {offsets = [1, 0, 2, 0], sizes = [1, 8, 6, 256], strides = [1, 1, 1, 1]} : vector<3x8x8x256xf32> to vector<1x8x6x256xf32>
    %91 = vector.shape_cast %90 : vector<1x8x6x256xf32> to vector<8x6x256xf32>
    %c11 = arith.constant 11 : index
    %92 = memref.load %arg2[%c11] : memref<27xf32, #tpu.memory_space<smem>>
    %93 = vector.extract_strided_slice %91 {offsets = [0, 0, 0], sizes = [6, 6, 256], strides = [1, 1, 1]} : vector<8x6x256xf32> to vector<6x6x256xf32>
    %94 = vector.broadcast %92 : f32 to vector<6x6x256xf32>
    %95 = arith.mulf %93, %94 : vector<6x6x256xf32>
    %96 = arith.addf %89, %95 : vector<6x6x256xf32>
    %c14 = arith.constant 14 : index
    %97 = memref.load %arg2[%c14] : memref<27xf32, #tpu.memory_space<smem>>
    %98 = vector.extract_strided_slice %91 {offsets = [1, 0, 0], sizes = [6, 6, 256], strides = [1, 1, 1]} : vector<8x6x256xf32> to vector<6x6x256xf32>
    %99 = vector.broadcast %97 : f32 to vector<6x6x256xf32>
    %100 = arith.mulf %98, %99 : vector<6x6x256xf32>
    %101 = arith.addf %96, %100 : vector<6x6x256xf32>
    %c17 = arith.constant 17 : index
    %102 = memref.load %arg2[%c17] : memref<27xf32, #tpu.memory_space<smem>>
    %103 = vector.extract_strided_slice %91 {offsets = [2, 0, 0], sizes = [6, 6, 256], strides = [1, 1, 1]} : vector<8x6x256xf32> to vector<6x6x256xf32>
    %104 = vector.broadcast %102 : f32 to vector<6x6x256xf32>
    %105 = arith.mulf %103, %104 : vector<6x6x256xf32>
    %106 = arith.addf %101, %105 : vector<6x6x256xf32>
    %107 = vector.extract_strided_slice %5 {offsets = [2, 0, 0, 0], sizes = [1, 8, 6, 256], strides = [1, 1, 1, 1]} : vector<3x8x8x256xf32> to vector<1x8x6x256xf32>
    %108 = vector.shape_cast %107 : vector<1x8x6x256xf32> to vector<8x6x256xf32>
    %c18 = arith.constant 18 : index
    %109 = memref.load %arg2[%c18] : memref<27xf32, #tpu.memory_space<smem>>
    %110 = vector.extract_strided_slice %108 {offsets = [0, 0, 0], sizes = [6, 6, 256], strides = [1, 1, 1]} : vector<8x6x256xf32> to vector<6x6x256xf32>
    %111 = vector.broadcast %109 : f32 to vector<6x6x256xf32>
    %112 = arith.mulf %110, %111 : vector<6x6x256xf32>
    %113 = arith.addf %106, %112 : vector<6x6x256xf32>
    %c21 = arith.constant 21 : index
    %114 = memref.load %arg2[%c21] : memref<27xf32, #tpu.memory_space<smem>>
    %115 = vector.extract_strided_slice %108 {offsets = [1, 0, 0], sizes = [6, 6, 256], strides = [1, 1, 1]} : vector<8x6x256xf32> to vector<6x6x256xf32>
    %116 = vector.broadcast %114 : f32 to vector<6x6x256xf32>
    %117 = arith.mulf %115, %116 : vector<6x6x256xf32>
    %118 = arith.addf %113, %117 : vector<6x6x256xf32>
    %c24 = arith.constant 24 : index
    %119 = memref.load %arg2[%c24] : memref<27xf32, #tpu.memory_space<smem>>
    %120 = vector.extract_strided_slice %108 {offsets = [2, 0, 0], sizes = [6, 6, 256], strides = [1, 1, 1]} : vector<8x6x256xf32> to vector<6x6x256xf32>
    %121 = vector.broadcast %119 : f32 to vector<6x6x256xf32>
    %122 = arith.mulf %120, %121 : vector<6x6x256xf32>
    %123 = arith.addf %118, %122 : vector<6x6x256xf32>
    %124 = vector.extract_strided_slice %5 {offsets = [2, 0, 1, 0], sizes = [1, 8, 6, 256], strides = [1, 1, 1, 1]} : vector<3x8x8x256xf32> to vector<1x8x6x256xf32>
    %125 = vector.shape_cast %124 : vector<1x8x6x256xf32> to vector<8x6x256xf32>
    %c19 = arith.constant 19 : index
    %126 = memref.load %arg2[%c19] : memref<27xf32, #tpu.memory_space<smem>>
    %127 = vector.extract_strided_slice %125 {offsets = [0, 0, 0], sizes = [6, 6, 256], strides = [1, 1, 1]} : vector<8x6x256xf32> to vector<6x6x256xf32>
    %128 = vector.broadcast %126 : f32 to vector<6x6x256xf32>
    %129 = arith.mulf %127, %128 : vector<6x6x256xf32>
    %130 = arith.addf %123, %129 : vector<6x6x256xf32>
    %c22 = arith.constant 22 : index
    %131 = memref.load %arg2[%c22] : memref<27xf32, #tpu.memory_space<smem>>
    %132 = vector.extract_strided_slice %125 {offsets = [1, 0, 0], sizes = [6, 6, 256], strides = [1, 1, 1]} : vector<8x6x256xf32> to vector<6x6x256xf32>
    %133 = vector.broadcast %131 : f32 to vector<6x6x256xf32>
    %134 = arith.mulf %132, %133 : vector<6x6x256xf32>
    %135 = arith.addf %130, %134 : vector<6x6x256xf32>
    %c25 = arith.constant 25 : index
    %136 = memref.load %arg2[%c25] : memref<27xf32, #tpu.memory_space<smem>>
    %137 = vector.extract_strided_slice %125 {offsets = [2, 0, 0], sizes = [6, 6, 256], strides = [1, 1, 1]} : vector<8x6x256xf32> to vector<6x6x256xf32>
    %138 = vector.broadcast %136 : f32 to vector<6x6x256xf32>
    %139 = arith.mulf %137, %138 : vector<6x6x256xf32>
    %140 = arith.addf %135, %139 : vector<6x6x256xf32>
    %141 = vector.extract_strided_slice %5 {offsets = [2, 0, 2, 0], sizes = [1, 8, 6, 256], strides = [1, 1, 1, 1]} : vector<3x8x8x256xf32> to vector<1x8x6x256xf32>
    %142 = vector.shape_cast %141 : vector<1x8x6x256xf32> to vector<8x6x256xf32>
    %c20 = arith.constant 20 : index
    %143 = memref.load %arg2[%c20] : memref<27xf32, #tpu.memory_space<smem>>
    %144 = vector.extract_strided_slice %142 {offsets = [0, 0, 0], sizes = [6, 6, 256], strides = [1, 1, 1]} : vector<8x6x256xf32> to vector<6x6x256xf32>
    %145 = vector.broadcast %143 : f32 to vector<6x6x256xf32>
    %146 = arith.mulf %144, %145 : vector<6x6x256xf32>
    %147 = arith.addf %140, %146 : vector<6x6x256xf32>
    %c23 = arith.constant 23 : index
    %148 = memref.load %arg2[%c23] : memref<27xf32, #tpu.memory_space<smem>>
    %149 = vector.extract_strided_slice %142 {offsets = [1, 0, 0], sizes = [6, 6, 256], strides = [1, 1, 1]} : vector<8x6x256xf32> to vector<6x6x256xf32>
    %150 = vector.broadcast %148 : f32 to vector<6x6x256xf32>
    %151 = arith.mulf %149, %150 : vector<6x6x256xf32>
    %152 = arith.addf %147, %151 : vector<6x6x256xf32>
    %c26 = arith.constant 26 : index
    %153 = memref.load %arg2[%c26] : memref<27xf32, #tpu.memory_space<smem>>
    %154 = vector.extract_strided_slice %142 {offsets = [2, 0, 0], sizes = [6, 6, 256], strides = [1, 1, 1]} : vector<8x6x256xf32> to vector<6x6x256xf32>
    %155 = vector.broadcast %153 : f32 to vector<6x6x256xf32>
    %156 = arith.mulf %154, %155 : vector<6x6x256xf32>
    %157 = arith.addf %152, %156 : vector<6x6x256xf32>
    %158 = vector.extract_strided_slice %157 {offsets = [0, 0, 0], sizes = [1, 6, 256], strides = [1, 1, 1]} : vector<6x6x256xf32> to vector<1x6x256xf32>
    %159 = vector.shape_cast %158 : vector<1x6x256xf32> to vector<6x256xf32>
    %160 = vector.extract_strided_slice %157 {offsets = [1, 0, 0], sizes = [1, 6, 256], strides = [1, 1, 1]} : vector<6x6x256xf32> to vector<1x6x256xf32>
    %161 = vector.shape_cast %160 : vector<1x6x256xf32> to vector<6x256xf32>
    %162 = arith.maximumf %159, %161 : vector<6x256xf32>
    %163 = vector.extract_strided_slice %157 {offsets = [2, 0, 0], sizes = [1, 6, 256], strides = [1, 1, 1]} : vector<6x6x256xf32> to vector<1x6x256xf32>
    %164 = vector.shape_cast %163 : vector<1x6x256xf32> to vector<6x256xf32>
    %165 = vector.extract_strided_slice %157 {offsets = [3, 0, 0], sizes = [1, 6, 256], strides = [1, 1, 1]} : vector<6x6x256xf32> to vector<1x6x256xf32>
    %166 = vector.shape_cast %165 : vector<1x6x256xf32> to vector<6x256xf32>
    %167 = arith.maximumf %164, %166 : vector<6x256xf32>
    %168 = vector.extract_strided_slice %157 {offsets = [4, 0, 0], sizes = [1, 6, 256], strides = [1, 1, 1]} : vector<6x6x256xf32> to vector<1x6x256xf32>
    %169 = vector.shape_cast %168 : vector<1x6x256xf32> to vector<6x256xf32>
    %170 = vector.extract_strided_slice %157 {offsets = [5, 0, 0], sizes = [1, 6, 256], strides = [1, 1, 1]} : vector<6x6x256xf32> to vector<1x6x256xf32>
    %171 = vector.shape_cast %170 : vector<1x6x256xf32> to vector<6x256xf32>
    %172 = arith.maximumf %169, %171 : vector<6x256xf32>
    %173 = vector.extract_strided_slice %162 {offsets = [0, 0], sizes = [1, 256], strides = [1, 1]} : vector<6x256xf32> to vector<1x256xf32>
    %174 = vector.extract_strided_slice %162 {offsets = [1, 0], sizes = [1, 256], strides = [1, 1]} : vector<6x256xf32> to vector<1x256xf32>
    %175 = arith.maximumf %173, %174 : vector<1x256xf32>
    %c0_1 = arith.constant 0 : index
    %176 = memref.load %arg3[%c0_1] : memref<1xf32, #tpu.memory_space<smem>>
    %177 = vector.broadcast %176 : f32 to vector<1x256xf32>
    %178 = arith.addf %175, %177 : vector<1x256xf32>
    %cst = arith.constant 0.000000e+00 : f32
    %179 = vector.broadcast %cst : f32 to vector<1x256xf32>
    %180 = arith.maximumf %178, %179 : vector<1x256xf32>
    %c0_2 = arith.constant 0 : index
    %181 = memref.load %arg4[%c0_2] : memref<18xf32, #tpu.memory_space<smem>>
    %182 = vector.broadcast %181 : f32 to vector<1x256xf32>
    %183 = arith.mulf %180, %182 : vector<1x256xf32>
    %c1_3 = arith.constant 1 : index
    %184 = memref.load %arg4[%c1_3] : memref<18xf32, #tpu.memory_space<smem>>
    %185 = vector.broadcast %184 : f32 to vector<1x256xf32>
    %186 = arith.mulf %180, %185 : vector<1x256xf32>
    %187 = vector.extract_strided_slice %162 {offsets = [2, 0], sizes = [1, 256], strides = [1, 1]} : vector<6x256xf32> to vector<1x256xf32>
    %188 = vector.extract_strided_slice %162 {offsets = [3, 0], sizes = [1, 256], strides = [1, 1]} : vector<6x256xf32> to vector<1x256xf32>
    %189 = arith.maximumf %187, %188 : vector<1x256xf32>
    %c0_4 = arith.constant 0 : index
    %190 = memref.load %arg3[%c0_4] : memref<1xf32, #tpu.memory_space<smem>>
    %191 = vector.broadcast %190 : f32 to vector<1x256xf32>
    %192 = arith.addf %189, %191 : vector<1x256xf32>
    %cst_5 = arith.constant 0.000000e+00 : f32
    %193 = vector.broadcast %cst_5 : f32 to vector<1x256xf32>
    %194 = arith.maximumf %192, %193 : vector<1x256xf32>
    %c2_6 = arith.constant 2 : index
    %195 = memref.load %arg4[%c2_6] : memref<18xf32, #tpu.memory_space<smem>>
    %196 = vector.broadcast %195 : f32 to vector<1x256xf32>
    %197 = arith.mulf %194, %196 : vector<1x256xf32>
    %c3_7 = arith.constant 3 : index
    %198 = memref.load %arg4[%c3_7] : memref<18xf32, #tpu.memory_space<smem>>
    %199 = vector.broadcast %198 : f32 to vector<1x256xf32>
    %200 = arith.mulf %194, %199 : vector<1x256xf32>
    %201 = arith.addf %183, %197 : vector<1x256xf32>
    %202 = arith.addf %186, %200 : vector<1x256xf32>
    %203 = vector.extract_strided_slice %162 {offsets = [4, 0], sizes = [1, 256], strides = [1, 1]} : vector<6x256xf32> to vector<1x256xf32>
    %204 = vector.extract_strided_slice %162 {offsets = [5, 0], sizes = [1, 256], strides = [1, 1]} : vector<6x256xf32> to vector<1x256xf32>
    %205 = arith.maximumf %203, %204 : vector<1x256xf32>
    %c0_8 = arith.constant 0 : index
    %206 = memref.load %arg3[%c0_8] : memref<1xf32, #tpu.memory_space<smem>>
    %207 = vector.broadcast %206 : f32 to vector<1x256xf32>
    %208 = arith.addf %205, %207 : vector<1x256xf32>
    %cst_9 = arith.constant 0.000000e+00 : f32
    %209 = vector.broadcast %cst_9 : f32 to vector<1x256xf32>
    %210 = arith.maximumf %208, %209 : vector<1x256xf32>
    %c4_10 = arith.constant 4 : index
    %211 = memref.load %arg4[%c4_10] : memref<18xf32, #tpu.memory_space<smem>>
    %212 = vector.broadcast %211 : f32 to vector<1x256xf32>
    %213 = arith.mulf %210, %212 : vector<1x256xf32>
    %c5_11 = arith.constant 5 : index
    %214 = memref.load %arg4[%c5_11] : memref<18xf32, #tpu.memory_space<smem>>
    %215 = vector.broadcast %214 : f32 to vector<1x256xf32>
    %216 = arith.mulf %210, %215 : vector<1x256xf32>
    %217 = arith.addf %201, %213 : vector<1x256xf32>
    %218 = arith.addf %202, %216 : vector<1x256xf32>
    %219 = vector.extract_strided_slice %167 {offsets = [0, 0], sizes = [1, 256], strides = [1, 1]} : vector<6x256xf32> to vector<1x256xf32>
    %220 = vector.extract_strided_slice %167 {offsets = [1, 0], sizes = [1, 256], strides = [1, 1]} : vector<6x256xf32> to vector<1x256xf32>
    %221 = arith.maximumf %219, %220 : vector<1x256xf32>
    %c0_12 = arith.constant 0 : index
    %222 = memref.load %arg3[%c0_12] : memref<1xf32, #tpu.memory_space<smem>>
    %223 = vector.broadcast %222 : f32 to vector<1x256xf32>
    %224 = arith.addf %221, %223 : vector<1x256xf32>
    %cst_13 = arith.constant 0.000000e+00 : f32
    %225 = vector.broadcast %cst_13 : f32 to vector<1x256xf32>
    %226 = arith.maximumf %224, %225 : vector<1x256xf32>
    %c6_14 = arith.constant 6 : index
    %227 = memref.load %arg4[%c6_14] : memref<18xf32, #tpu.memory_space<smem>>
    %228 = vector.broadcast %227 : f32 to vector<1x256xf32>
    %229 = arith.mulf %226, %228 : vector<1x256xf32>
    %c7_15 = arith.constant 7 : index
    %230 = memref.load %arg4[%c7_15] : memref<18xf32, #tpu.memory_space<smem>>
    %231 = vector.broadcast %230 : f32 to vector<1x256xf32>
    %232 = arith.mulf %226, %231 : vector<1x256xf32>
    %233 = arith.addf %217, %229 : vector<1x256xf32>
    %234 = arith.addf %218, %232 : vector<1x256xf32>
    %235 = vector.extract_strided_slice %167 {offsets = [2, 0], sizes = [1, 256], strides = [1, 1]} : vector<6x256xf32> to vector<1x256xf32>
    %236 = vector.extract_strided_slice %167 {offsets = [3, 0], sizes = [1, 256], strides = [1, 1]} : vector<6x256xf32> to vector<1x256xf32>
    %237 = arith.maximumf %235, %236 : vector<1x256xf32>
    %c0_16 = arith.constant 0 : index
    %238 = memref.load %arg3[%c0_16] : memref<1xf32, #tpu.memory_space<smem>>
    %239 = vector.broadcast %238 : f32 to vector<1x256xf32>
    %240 = arith.addf %237, %239 : vector<1x256xf32>
    %cst_17 = arith.constant 0.000000e+00 : f32
    %241 = vector.broadcast %cst_17 : f32 to vector<1x256xf32>
    %242 = arith.maximumf %240, %241 : vector<1x256xf32>
    %c8_18 = arith.constant 8 : index
    %243 = memref.load %arg4[%c8_18] : memref<18xf32, #tpu.memory_space<smem>>
    %244 = vector.broadcast %243 : f32 to vector<1x256xf32>
    %245 = arith.mulf %242, %244 : vector<1x256xf32>
    %c9_19 = arith.constant 9 : index
    %246 = memref.load %arg4[%c9_19] : memref<18xf32, #tpu.memory_space<smem>>
    %247 = vector.broadcast %246 : f32 to vector<1x256xf32>
    %248 = arith.mulf %242, %247 : vector<1x256xf32>
    %249 = arith.addf %233, %245 : vector<1x256xf32>
    %250 = arith.addf %234, %248 : vector<1x256xf32>
    %251 = vector.extract_strided_slice %167 {offsets = [4, 0], sizes = [1, 256], strides = [1, 1]} : vector<6x256xf32> to vector<1x256xf32>
    %252 = vector.extract_strided_slice %167 {offsets = [5, 0], sizes = [1, 256], strides = [1, 1]} : vector<6x256xf32> to vector<1x256xf32>
    %253 = arith.maximumf %251, %252 : vector<1x256xf32>
    %c0_20 = arith.constant 0 : index
    %254 = memref.load %arg3[%c0_20] : memref<1xf32, #tpu.memory_space<smem>>
    %255 = vector.broadcast %254 : f32 to vector<1x256xf32>
    %256 = arith.addf %253, %255 : vector<1x256xf32>
    %cst_21 = arith.constant 0.000000e+00 : f32
    %257 = vector.broadcast %cst_21 : f32 to vector<1x256xf32>
    %258 = arith.maximumf %256, %257 : vector<1x256xf32>
    %c10_22 = arith.constant 10 : index
    %259 = memref.load %arg4[%c10_22] : memref<18xf32, #tpu.memory_space<smem>>
    %260 = vector.broadcast %259 : f32 to vector<1x256xf32>
    %261 = arith.mulf %258, %260 : vector<1x256xf32>
    %c11_23 = arith.constant 11 : index
    %262 = memref.load %arg4[%c11_23] : memref<18xf32, #tpu.memory_space<smem>>
    %263 = vector.broadcast %262 : f32 to vector<1x256xf32>
    %264 = arith.mulf %258, %263 : vector<1x256xf32>
    %265 = arith.addf %249, %261 : vector<1x256xf32>
    %266 = arith.addf %250, %264 : vector<1x256xf32>
    %267 = vector.extract_strided_slice %172 {offsets = [0, 0], sizes = [1, 256], strides = [1, 1]} : vector<6x256xf32> to vector<1x256xf32>
    %268 = vector.extract_strided_slice %172 {offsets = [1, 0], sizes = [1, 256], strides = [1, 1]} : vector<6x256xf32> to vector<1x256xf32>
    %269 = arith.maximumf %267, %268 : vector<1x256xf32>
    %c0_24 = arith.constant 0 : index
    %270 = memref.load %arg3[%c0_24] : memref<1xf32, #tpu.memory_space<smem>>
    %271 = vector.broadcast %270 : f32 to vector<1x256xf32>
    %272 = arith.addf %269, %271 : vector<1x256xf32>
    %cst_25 = arith.constant 0.000000e+00 : f32
    %273 = vector.broadcast %cst_25 : f32 to vector<1x256xf32>
    %274 = arith.maximumf %272, %273 : vector<1x256xf32>
    %c12_26 = arith.constant 12 : index
    %275 = memref.load %arg4[%c12_26] : memref<18xf32, #tpu.memory_space<smem>>
    %276 = vector.broadcast %275 : f32 to vector<1x256xf32>
    %277 = arith.mulf %274, %276 : vector<1x256xf32>
    %c13_27 = arith.constant 13 : index
    %278 = memref.load %arg4[%c13_27] : memref<18xf32, #tpu.memory_space<smem>>
    %279 = vector.broadcast %278 : f32 to vector<1x256xf32>
    %280 = arith.mulf %274, %279 : vector<1x256xf32>
    %281 = arith.addf %265, %277 : vector<1x256xf32>
    %282 = arith.addf %266, %280 : vector<1x256xf32>
    %283 = vector.extract_strided_slice %172 {offsets = [2, 0], sizes = [1, 256], strides = [1, 1]} : vector<6x256xf32> to vector<1x256xf32>
    %284 = vector.extract_strided_slice %172 {offsets = [3, 0], sizes = [1, 256], strides = [1, 1]} : vector<6x256xf32> to vector<1x256xf32>
    %285 = arith.maximumf %283, %284 : vector<1x256xf32>
    %c0_28 = arith.constant 0 : index
    %286 = memref.load %arg3[%c0_28] : memref<1xf32, #tpu.memory_space<smem>>
    %287 = vector.broadcast %286 : f32 to vector<1x256xf32>
    %288 = arith.addf %285, %287 : vector<1x256xf32>
    %cst_29 = arith.constant 0.000000e+00 : f32
    %289 = vector.broadcast %cst_29 : f32 to vector<1x256xf32>
    %290 = arith.maximumf %288, %289 : vector<1x256xf32>
    %c14_30 = arith.constant 14 : index
    %291 = memref.load %arg4[%c14_30] : memref<18xf32, #tpu.memory_space<smem>>
    %292 = vector.broadcast %291 : f32 to vector<1x256xf32>
    %293 = arith.mulf %290, %292 : vector<1x256xf32>
    %c15_31 = arith.constant 15 : index
    %294 = memref.load %arg4[%c15_31] : memref<18xf32, #tpu.memory_space<smem>>
    %295 = vector.broadcast %294 : f32 to vector<1x256xf32>
    %296 = arith.mulf %290, %295 : vector<1x256xf32>
    %297 = arith.addf %281, %293 : vector<1x256xf32>
    %298 = arith.addf %282, %296 : vector<1x256xf32>
    %299 = vector.extract_strided_slice %172 {offsets = [4, 0], sizes = [1, 256], strides = [1, 1]} : vector<6x256xf32> to vector<1x256xf32>
    %300 = vector.extract_strided_slice %172 {offsets = [5, 0], sizes = [1, 256], strides = [1, 1]} : vector<6x256xf32> to vector<1x256xf32>
    %301 = arith.maximumf %299, %300 : vector<1x256xf32>
    %c0_32 = arith.constant 0 : index
    %302 = memref.load %arg3[%c0_32] : memref<1xf32, #tpu.memory_space<smem>>
    %303 = vector.broadcast %302 : f32 to vector<1x256xf32>
    %304 = arith.addf %301, %303 : vector<1x256xf32>
    %cst_33 = arith.constant 0.000000e+00 : f32
    %305 = vector.broadcast %cst_33 : f32 to vector<1x256xf32>
    %306 = arith.maximumf %304, %305 : vector<1x256xf32>
    %c16_34 = arith.constant 16 : index
    %307 = memref.load %arg4[%c16_34] : memref<18xf32, #tpu.memory_space<smem>>
    %308 = vector.broadcast %307 : f32 to vector<1x256xf32>
    %309 = arith.mulf %306, %308 : vector<1x256xf32>
    %c17_35 = arith.constant 17 : index
    %310 = memref.load %arg4[%c17_35] : memref<18xf32, #tpu.memory_space<smem>>
    %311 = vector.broadcast %310 : f32 to vector<1x256xf32>
    %312 = arith.mulf %306, %311 : vector<1x256xf32>
    %313 = arith.addf %297, %309 : vector<1x256xf32>
    %314 = arith.addf %298, %312 : vector<1x256xf32>
    %c0_36 = arith.constant 0 : index
    %315 = memref.load %arg5[%c0_36] : memref<2xf32, #tpu.memory_space<smem>>
    %316 = vector.broadcast %315 : f32 to vector<1x256xf32>
    %317 = arith.addf %313, %316 : vector<1x256xf32>
    %cst_37 = arith.constant 0.000000e+00 : f32
    %318 = vector.broadcast %cst_37 : f32 to vector<1x256xf32>
    %319 = arith.maximumf %317, %318 : vector<1x256xf32>
    %c1_38 = arith.constant 1 : index
    %320 = memref.load %arg5[%c1_38] : memref<2xf32, #tpu.memory_space<smem>>
    %321 = vector.broadcast %320 : f32 to vector<1x256xf32>
    %322 = arith.addf %314, %321 : vector<1x256xf32>
    %cst_39 = arith.constant 0.000000e+00 : f32
    %323 = vector.broadcast %cst_39 : f32 to vector<1x256xf32>
    %324 = arith.maximumf %322, %323 : vector<1x256xf32>
    %325 = tpu.concatenate %319, %324 in 0 : vector<1x256xf32>, vector<1x256xf32> -> vector<2x256xf32>
    %c0_40 = arith.constant 0 : index
    %326 = arith.index_cast %1 : i32 to index
    %327 = vector.load %arg6[%c0_40, %326] : memref<2x256xf32, #tpu.memory_space<vmem>>, vector<2x256xf32>
    tpu.vector_store %arg6[%c0_40, %326], %325 {strides = array<i32>} : memref<2x256xf32, #tpu.memory_space<vmem>>, vector<2x256xf32>,
    %c1_i32 = arith.constant 1 : i32
    return
  }
  func.func @transform_0(%arg0: i32) -> (i32, i32) {
    %c0_i32 = arith.constant 0 : i32
    %c0_i32_0 = arith.constant 0 : i32
    return %arg0, %c0_i32 : i32, i32
  }
  func.func @transform_1(%arg0: i32) -> i32 {
    %c0_i32 = arith.constant 0 : i32
    %c0_i32_0 = arith.constant 0 : i32
    return %c0_i32 : i32
  }
  func.func @transform_2(%arg0: i32) -> i32 {
    %c0_i32 = arith.constant 0 : i32
    %c0_i32_0 = arith.constant 0 : i32
    return %c0_i32 : i32
  }
  func.func @transform_3(%arg0: i32) -> i32 {
    %c0_i32 = arith.constant 0 : i32
    %c0_i32_0 = arith.constant 0 : i32
    return %c0_i32 : i32
  }
  func.func @transform_4(%arg0: i32) -> i32 {
    %c0_i32 = arith.constant 0 : i32
    %c0_i32_0 = arith.constant 0 : i32
    return %c0_i32 : i32
  }
  func.func @transform_5(%arg0: i32) -> (i32, i32) {
    %c0_i32 = arith.constant 0 : i32
    %c0_i32_0 = arith.constant 0 : i32
    return %c0_i32, %arg0 : i32, i32
  }
}

</mosaic_0001>

<llo_original>
// kernel: net_forward.1
$region0: #{net_forward.1}
  #allocation0 [shape = 'u32[]', space=smem, size = 0x4, offset = 0x4, fixed_abs, tag = 'smem constant byte address 0x4 - core index']
  #allocation1 [shape = 'u32[144,128]{1,0:T(1,128)}', space=vmem, size = 0x12000, scoped, tag = 'internal scratch']
  #allocation2 [shape = 'f32[1]{0:T(128)S(6)}', space=smem, size = 0x200, scoped, tag = 'scoped memory for net_forward.1']
  %s0 = inlined_call_operand.vmem [shape: f32[256,192], index: 0, kind: input, shape index: {}]
  %s1 = inlined_call_operand.vmem [shape: f32[27], index: 1, kind: input, shape index: {}]
  %s2 = inlined_call_operand.<no memory space> [shape: f32[1], index: 2, kind: input, shape index: {}]
  %s3 = inlined_call_operand.vmem [shape: f32[18], index: 3, kind: input, shape index: {}]
  %s4 = inlined_call_operand.vmem [shape: f32[2], index: 4, kind: input, shape index: {}]
  %s5 = inlined_call_operand.vmem [shape: f32[2,256], index: 5, kind: output, shape index: {}]
  %s6 = sld [smem:[#allocation0]]
  $region42: #{net_forward.1} parent=0
    _
  %s8 = ssub.s32 1, %s6
  %s9 = scalar_select 0, %s8, %s6
  %10 = sst [smem:[#allocation2]] %s2
  $region1: #{net_forward.1} parent=0
    #allocation3 [shape = 'u8[512]{0}', space=smem, size = 0x200, scoped, tag = 'input window, operand 1, single buffered']
    #allocation4 [shape = 's32[1]{0}', space=sflag, size = 0x4, scoped, tag = 'scoped memory for net_forward.1']
    #allocation5 [shape = 'u8[512]{0}', space=smem, size = 0x200, scoped, tag = 'input window, operand 3, single buffered']
    #allocation6 [shape = 's32[1]{0}', space=sflag, size = 0x4, scoped, tag = 'scoped memory for net_forward.1']
    #allocation7 [shape = 'u8[512]{0}', space=smem, size = 0x200, scoped, tag = 'input window, operand 4, single buffered']
    %11 = vsyncpa [#allocation4], 0
    %12 = vsyncpa [#allocation6], 0
    // Predicated region
    $region2: #{net_forward.1} parent=1 // pred_check
      _
    $region3: #{net_forward.1} parent=1 // pred_check_branch
      %14 = sbr.rel (0) target = $region5
    $region4: #{net_forward.1} parent=1 // pred_region
      _
    $region5: #{net_forward.1} parent=1 // pred_fallthru
      _
    // Predicated region
    $region6: #{net_forward.1} parent=1 // pred_check
      _
    $region7: #{net_forward.1} parent=1 // pred_check_branch
      %16 = sbr.rel (0) target = $region9
    $region8: #{net_forward.1} parent=1 // pred_region
      %s18 = ssub.s32 16, 16
      %19 = vsyncadd [#allocation4], %s18
      %s21 = sshll.u32 %s1, 4
      %s22 = int_to_ptr.vmem [resolvable:$true] %s21
      %24 = dma.vmem_to_smem %s22, 16, [#allocation3], [#allocation4]
    $region9: #{net_forward.1} parent=1 // pred_fallthru
      _
    // Predicated region
    $region10: #{net_forward.1} parent=1 // pred_check
      _
    $region11: #{net_forward.1} parent=1 // pred_check_branch
      %26 = sbr.rel (0) target = $region13
    $region12: #{net_forward.1} parent=1 // pred_region
      _
    $region13: #{net_forward.1} parent=1 // pred_fallthru
      _
    // Predicated region
    $region14: #{net_forward.1} parent=1 // pred_check
      _
    $region15: #{net_forward.1} parent=1 // pred_check_branch
      %28 = sbr.rel (0) target = $region17
    $region16: #{net_forward.1} parent=1 // pred_region
      %s30 = ssub.s32 16, 16
      %31 = vsyncadd [#allocation6], %s30
      %s33 = sshll.u32 %s3, 4
      %s34 = int_to_ptr.vmem [resolvable:$true] %s33
      %36 = dma.vmem_to_smem %s34, 16, [#allocation5], [#allocation6]
    $region17: #{net_forward.1} parent=1 // pred_fallthru
      _
    // Predicated region
    $region18: #{net_forward.1} parent=1 // pred_check
      _
    $region19: #{net_forward.1} parent=1 // pred_check_branch
      %38 = sbr.rel (0) target = $region21
    $region20: #{net_forward.1} parent=1 // pred_region
      %s40 = ssub.s32 16, 16
      %41 = vsyncadd [#allocation6], %s40
      %s43 = sshll.u32 %s4, 4
      %s44 = int_to_ptr.vmem [resolvable:$true] %s43
      %46 = dma.vmem_to_smem %s44, 16, [#allocation7], [#allocation6]
    $region21: #{net_forward.1} parent=1 // pred_fallthru
      _
    // Predicated region
    $region22: #{net_forward.1} parent=1 // pred_check
      _
    $region23: #{net_forward.1} parent=1 // pred_check_branch
      %48 = sbr.rel (0) target = $region25
    $region24: #{net_forward.1} parent=1 // pred_region
      %49 = dma.done [#allocation4], 16
    $region25: #{net_forward.1} parent=1 // pred_fallthru
      _
    // Predicated region
    $region26: #{net_forward.1} parent=1 // pred_check
      _
    $region27: #{net_forward.1} parent=1 // pred_check_branch
      %51 = sbr.rel (0) target = $region29
    $region28: #{net_forward.1} parent=1 // pred_region
      %52 = dma.done [#allocation6], 16
    $region29: #{net_forward.1} parent=1 // pred_fallthru
      _
    // Predicated region
    $region30: #{net_forward.1} parent=1 // pred_check
      _
    $region31: #{net_forward.1} parent=1 // pred_check_branch
      %54 = sbr.rel (0) target = $region33
    $region32: #{net_forward.1} parent=1 // pred_region
      %55 = dma.done [#allocation6], 16
    $region33: #{net_forward.1} parent=1 // pred_fallthru
      _
    %56 = sfence
    %s57 = smul.u32 0, 2
    %s58 = smul.addr %s57, 8
    %s59 = scalar_lea.vmem %s0, %s58
    %v60 = vld [vmem:[%s59] sm:$0xff]
    %v61 = vld [vmem:[%s59 + $0x8] sm:$0xff]
    %v62 = vld [vmem:[%s59 + $0x10] sm:$0xff]
    %v63 = vld [vmem:[%s59 + $0x18] sm:$0xff]
    %v64 = vld [vmem:[%s59 + $0x20] sm:$0xff]
    %v65 = vld [vmem:[%s59 + $0x28] sm:$0xff]
    %v66 = vld [vmem:[%s59 + $0x30] sm:$0xff]
    %v67 = vld [vmem:[%s59 + $0x38] sm:$0xff]
    %v68 = vld [vmem:[%s59 + $0x40] sm:$0xff]
    %v69 = vld [vmem:[%s59 + $0x48] sm:$0xff]
    %v70 = vld [vmem:[%s59 + $0x50] sm:$0xff]
    %v71 = vld [vmem:[%s59 + $0x58] sm:$0xff]
    %v72 = vld [vmem:[%s59 + $0x60] sm:$0xff]
    %v73 = vld [vmem:[%s59 + $0x68] sm:$0xff]
    %v74 = vld [vmem:[%s59 + $0x70] sm:$0xff]
    %v75 = vld [vmem:[%s59 + $0x78] sm:$0xff]
    %v76 = vld [vmem:[%s59 + $0x80] sm:$0xff]
    %v77 = vld [vmem:[%s59 + $0x88] sm:$0xff]
    %v78 = vld [vmem:[%s59 + $0x90] sm:$0xff]
    %v79 = vld [vmem:[%s59 + $0x98] sm:$0xff]
    %v80 = vld [vmem:[%s59 + $0xa0] sm:$0xff]
    %v81 = vld [vmem:[%s59 + $0xa8] sm:$0xff]
    %v82 = vld [vmem:[%s59 + $0xb0] sm:$0xff]
    %v83 = vld [vmem:[%s59 + $0xb8] sm:$0xff]
    %v84 = vld [vmem:[%s59 + $0xc0] sm:$0xff]
    %v85 = vld [vmem:[%s59 + $0xc8] sm:$0xff]
    %v86 = vld [vmem:[%s59 + $0xd0] sm:$0xff]
    %v87 = vld [vmem:[%s59 + $0xd8] sm:$0xff]
    %v88 = vld [vmem:[%s59 + $0xe0] sm:$0xff]
    %v89 = vld [vmem:[%s59 + $0xe8] sm:$0xff]
    %v90 = vld [vmem:[%s59 + $0xf0] sm:$0xff]
    %v91 = vld [vmem:[%s59 + $0xf8] sm:$0xff]
    %v92 = vld [vmem:[%s59 + $0x100] sm:$0xff]
    %v93 = vld [vmem:[%s59 + $0x108] sm:$0xff]
    %v94 = vld [vmem:[%s59 + $0x110] sm:$0xff]
    %v95 = vld [vmem:[%s59 + $0x118] sm:$0xff]
    %v96 = vld [vmem:[%s59 + $0x120] sm:$0xff]
    %v97 = vld [vmem:[%s59 + $0x128] sm:$0xff]
    %v98 = vld [vmem:[%s59 + $0x130] sm:$0xff]
    %v99 = vld [vmem:[%s59 + $0x138] sm:$0xff]
    %v100 = vld [vmem:[%s59 + $0x140] sm:$0xff]
    %v101 = vld [vmem:[%s59 + $0x148] sm:$0xff]
    %v102 = vld [vmem:[%s59 + $0x150] sm:$0xff]
    %v103 = vld [vmem:[%s59 + $0x158] sm:$0xff]
    %v104 = vld [vmem:[%s59 + $0x160] sm:$0xff]
    %v105 = vld [vmem:[%s59 + $0x168] sm:$0xff]
    %v106 = vld [vmem:[%s59 + $0x170] sm:$0xff]
    %v107 = vld [vmem:[%s59 + $0x178] sm:$0xff]
    %v108 = vld [vmem:[%s59 + $0x180] sm:$0xff]
    %v109 = vld [vmem:[%s59 + $0x188] sm:$0xff]
    %v110 = vld [vmem:[%s59 + $0x190] sm:$0xff]
    %v111 = vld [vmem:[%s59 + $0x198] sm:$0xff]
    %v112 = vld [vmem:[%s59 + $0x1a0] sm:$0xff]
    %v113 = vld [vmem:[%s59 + $0x1a8] sm:$0xff]
    %v114 = vld [vmem:[%s59 + $0x1b0] sm:$0xff]
    %v115 = vld [vmem:[%s59 + $0x1b8] sm:$0xff]
    %v116 = vld [vmem:[%s59 + $0x1c0] sm:$0xff]
    %v117 = vld [vmem:[%s59 + $0x1c8] sm:$0xff]
    %v118 = vld [vmem:[%s59 + $0x1d0] sm:$0xff]
    %v119 = vld [vmem:[%s59 + $0x1d8] sm:$0xff]
    %v120 = vld [vmem:[%s59 + $0x1e0] sm:$0xff]
    %v121 = vld [vmem:[%s59 + $0x1e8] sm:$0xff]
    %v122 = vld [vmem:[%s59 + $0x1f0] sm:$0xff]
    %v123 = vld [vmem:[%s59 + $0x1f8] sm:$0xff]
    %124 = vxpose.xlu0.b32.start [1/16] %v60, 128
    %125 = vxpose.xlu0.b32.cont [2/16] %v62, 128
    %126 = vxpose.xlu0.b32.cont [3/16] %v64, 128
    %127 = vxpose.xlu0.b32.cont [4/16] %v66, 128
    %128 = vxpose.xlu0.b32.cont [5/16] %v68, 128
    %129 = vxpose.xlu0.b32.cont [6/16] %v70, 128
    %130 = vxpose.xlu0.b32.cont [7/16] %v72, 128
    %131 = vxpose.xlu0.b32.cont [8/16] %v74, 128
    %132 = vxpose.xlu0.b32.cont [9/16] %v76, 128
    %133 = vxpose.xlu0.b32.cont [10/16] %v78, 128
    %134 = vxpose.xlu0.b32.cont [11/16] %v80, 128
    %135 = vxpose.xlu0.b32.cont [12/16] %v82, 128
    %136 = vxpose.xlu0.b32.cont [13/16] %v84, 128
    %137 = vxpose.xlu0.b32.cont [14/16] %v86, 128
    %138 = vxpose.xlu0.b32.cont [15/16] %v88, 128
    %139 = vxpose.xlu0.b32.end [16/16] %v90, 128
    %v140 = vpop.trf.xlu0
    %v141 = vpop.trf.xlu0
    %v142 = vpop.trf.xlu0
    %v143 = vpop.trf.xlu0
    %v144 = vpop.trf.xlu0
    %v145 = vpop.trf.xlu0
    %v146 = vpop.trf.xlu0
    %v147 = vpop.trf.xlu0
    %v148 = vpop.trf.xlu0
    %v149 = vpop.trf.xlu0
    %v150 = vpop.trf.xlu0
    %v151 = vpop.trf.xlu0
    %v152 = vpop.trf.xlu0
    %v153 = vpop.trf.xlu0
    %v154 = vpop.trf.xlu0
    %v155 = vpop.trf.xlu0
    %156 = vxpose.xlu0.b32.start [1/16] %v61, 128
    %157 = vxpose.xlu0.b32.cont [2/16] %v63, 128
    %158 = vxpose.xlu0.b32.cont [3/16] %v65, 128
    %159 = vxpose.xlu0.b32.cont [4/16] %v67, 128
    %160 = vxpose.xlu0.b32.cont [5/16] %v69, 128
    %161 = vxpose.xlu0.b32.cont [6/16] %v71, 128
    %162 = vxpose.xlu0.b32.cont [7/16] %v73, 128
    %163 = vxpose.xlu0.b32.cont [8/16] %v75, 128
    %164 = vxpose.xlu0.b32.cont [9/16] %v77, 128
    %165 = vxpose.xlu0.b32.cont [10/16] %v79, 128
    %166 = vxpose.xlu0.b32.cont [11/16] %v81, 128
    %167 = vxpose.xlu0.b32.cont [12/16] %v83, 128
    %168 = vxpose.xlu0.b32.cont [13/16] %v85, 128
    %169 = vxpose.xlu0.b32.cont [14/16] %v87, 128
    %170 = vxpose.xlu0.b32.cont [15/16] %v89, 128
    %171 = vxpose.xlu0.b32.end [16/16] %v91, 128
    %v172 = vpop.trf.xlu0
    %v173 = vpop.trf.xlu0
    %v174 = vpop.trf.xlu0
    %v175 = vpop.trf.xlu0
    %v176 = vpop.trf.xlu0
    %v177 = vpop.trf.xlu0
    %v178 = vpop.trf.xlu0
    %v179 = vpop.trf.xlu0
    %v180 = vpop.trf.xlu0
    %v181 = vpop.trf.xlu0
    %v182 = vpop.trf.xlu0
    %v183 = vpop.trf.xlu0
    %v184 = vpop.trf.xlu0
    %v185 = vpop.trf.xlu0
    %v186 = vpop.trf.xlu0
    %v187 = vpop.trf.xlu0
    %188 = vxpose.xlu0.b32.start [1/16] %v92, 128
    %189 = vxpose.xlu0.b32.cont [2/16] %v94, 128
    %190 = vxpose.xlu0.b32.cont [3/16] %v96, 128
    %191 = vxpose.xlu0.b32.cont [4/16] %v98, 128
    %192 = vxpose.xlu0.b32.cont [5/16] %v100, 128
    %193 = vxpose.xlu0.b32.cont [6/16] %v102, 128
    %194 = vxpose.xlu0.b32.cont [7/16] %v104, 128
    %195 = vxpose.xlu0.b32.cont [8/16] %v106, 128
    %196 = vxpose.xlu0.b32.cont [9/16] %v108, 128
    %197 = vxpose.xlu0.b32.cont [10/16] %v110, 128
    %198 = vxpose.xlu0.b32.cont [11/16] %v112, 128
    %199 = vxpose.xlu0.b32.cont [12/16] %v114, 128
    %200 = vxpose.xlu0.b32.cont [13/16] %v116, 128
    %201 = vxpose.xlu0.b32.cont [14/16] %v118, 128
    %202 = vxpose.xlu0.b32.cont [15/16] %v120, 128
    %203 = vxpose.xlu0.b32.end [16/16] %v122, 128
    %v204 = vpop.trf.xlu0
    %v205 = vpop.trf.xlu0
    %v206 = vpop.trf.xlu0
    %v207 = vpop.trf.xlu0
    %v208 = vpop.trf.xlu0
    %v209 = vpop.trf.xlu0
    %v210 = vpop.trf.xlu0
    %v211 = vpop.trf.xlu0
    %v212 = vpop.trf.xlu0
    %v213 = vpop.trf.xlu0
    %v214 = vpop.trf.xlu0
    %v215 = vpop.trf.xlu0
    %v216 = vpop.trf.xlu0
    %v217 = vpop.trf.xlu0
    %v218 = vpop.trf.xlu0
    %v219 = vpop.trf.xlu0
    %220 = vxpose.xlu0.b32.start [1/16] %v93, 128
    %221 = vxpose.xlu0.b32.cont [2/16] %v95, 128
    %222 = vxpose.xlu0.b32.cont [3/16] %v97, 128
    %223 = vxpose.xlu0.b32.cont [4/16] %v99, 128
    %224 = vxpose.xlu0.b32.cont [5/16] %v101, 128
    %225 = vxpose.xlu0.b32.cont [6/16] %v103, 128
    %226 = vxpose.xlu0.b32.cont [7/16] %v105, 128
    %227 = vxpose.xlu0.b32.cont [8/16] %v107, 128
    %228 = vxpose.xlu0.b32.cont [9/16] %v109, 128
    %229 = vxpose.xlu0.b32.cont [10/16] %v111, 128
    %230 = vxpose.xlu0.b32.cont [11/16] %v113, 128
    %231 = vxpose.xlu0.b32.cont [12/16] %v115, 128
    %232 = vxpose.xlu0.b32.cont [13/16] %v117, 128
    %233 = vxpose.xlu0.b32.cont [14/16] %v119, 128
    %234 = vxpose.xlu0.b32.cont [15/16] %v121, 128
    %235 = vxpose.xlu0.b32.end [16/16] %v123, 128
    %v236 = vpop.trf.xlu0
    %v237 = vpop.trf.xlu0
    %v238 = vpop.trf.xlu0
    %v239 = vpop.trf.xlu0
    %v240 = vpop.trf.xlu0
    %v241 = vpop.trf.xlu0
    %v242 = vpop.trf.xlu0
    %v243 = vpop.trf.xlu0
    %v244 = vpop.trf.xlu0
    %v245 = vpop.trf.xlu0
    %v246 = vpop.trf.xlu0
    %v247 = vpop.trf.xlu0
    %v248 = vpop.trf.xlu0
    %v249 = vpop.trf.xlu0
    %v250 = vpop.trf.xlu0
    %v251 = vpop.trf.xlu0
    %s252 = sld [smem:[#allocation3]]
    %v253 = vstv %s252
    %v254 = vmul.f32 %v140, %v253
    %v255 = vmul.f32 %v204, %v253
    %v256 = vmul.f32 %v141, %v253
    %v257 = vmul.f32 %v205, %v253
    %v258 = vmul.f32 %v142, %v253
    %v259 = vmul.f32 %v206, %v253
    %v260 = vmul.f32 %v143, %v253
    %v261 = vmul.f32 %v207, %v253
    %v262 = vmul.f32 %v144, %v253
    %v263 = vmul.f32 %v208, %v253
    %v264 = vmul.f32 %v145, %v253
    %v265 = vmul.f32 %v209, %v253
    %s266 = sld [smem:[#allocation3 + $0x3]]
    %v267 = vstv %s266
    %v268 = vmul.f32 %v141, %v267
    %v269 = vmul.f32 %v205, %v267
    %v270 = vmul.f32 %v142, %v267
    %v271 = vmul.f32 %v206, %v267
    %v272 = vmul.f32 %v143, %v267
    %v273 = vmul.f32 %v207, %v267
    %v274 = vmul.f32 %v144, %v267
    %v275 = vmul.f32 %v208, %v267
    %v276 = vmul.f32 %v145, %v267
    %v277 = vmul.f32 %v209, %v267
    %v278 = vmul.f32 %v146, %v267
    %v279 = vmul.f32 %v210, %v267
    %v280 = vadd.f32 %v254, %v268
    %v281 = vadd.f32 %v255, %v269
    %v282 = vadd.f32 %v256, %v270
    %v283 = vadd.f32 %v257, %v271
    %v284 = vadd.f32 %v258, %v272
    %v285 = vadd.f32 %v259, %v273
    %v286 = vadd.f32 %v260, %v274
    %v287 = vadd.f32 %v261, %v275
    %v288 = vadd.f32 %v262, %v276
    %v289 = vadd.f32 %v263, %v277
    %v290 = vadd.f32 %v264, %v278
    %v291 = vadd.f32 %v265, %v279
    %s292 = sld [smem:[#allocation3 + $0x6]]
    %v293 = vstv %s292
    %v294 = vmul.f32 %v142, %v293
    %v295 = vmul.f32 %v206, %v293
    %v296 = vmul.f32 %v143, %v293
    %v297 = vmul.f32 %v207, %v293
    %v298 = vmul.f32 %v144, %v293
    %v299 = vmul.f32 %v208, %v293
    %v300 = vmul.f32 %v145, %v293
    %v301 = vmul.f32 %v209, %v293
    %v302 = vmul.f32 %v146, %v293
    %v303 = vmul.f32 %v210, %v293
    %v304 = vmul.f32 %v147, %v293
    %v305 = vmul.f32 %v211, %v293
    %v306 = vadd.f32 %v280, %v294
    %v307 = vadd.f32 %v281, %v295
    %v308 = vadd.f32 %v282, %v296
    %v309 = vadd.f32 %v283, %v297
    %v310 = vadd.f32 %v284, %v298
    %v311 = vadd.f32 %v285, %v299
    %v312 = vadd.f32 %v286, %v300
    %v313 = vadd.f32 %v287, %v301
    %v314 = vadd.f32 %v288, %v302
    %v315 = vadd.f32 %v289, %v303
    %v316 = vadd.f32 %v290, %v304
    %v317 = vadd.f32 %v291, %v305
    %s318 = sld [smem:[#allocation3 + $0x1]]
    %v319 = vstv %s318
    %v320 = vmul.f32 %v140, %v319
    %v321 = vmul.f32 %v204, %v319
    %v322 = vmul.f32 %v141, %v319
    %v323 = vmul.f32 %v205, %v319
    %v324 = vmul.f32 %v142, %v319
    %v325 = vmul.f32 %v206, %v319
    %v326 = vmul.f32 %v143, %v319
    %v327 = vmul.f32 %v207, %v319
    %v328 = vmul.f32 %v144, %v319
    %v329 = vmul.f32 %v208, %v319
    %v330 = vmul.f32 %v145, %v319
    %v331 = vmul.f32 %v209, %v319
    %v344 = vrot.slane %v320, 1
    %v345 = vrot.slane %v321, 1
    %v346 = vrot.slane %v322, 1
    %v347 = vrot.slane %v323, 1
    %v348 = vrot.slane %v324, 1
    %v349 = vrot.slane %v325, 1
    %v350 = vrot.slane %v326, 1
    %v351 = vrot.slane %v327, 1
    %v352 = vrot.slane %v328, 1
    %v353 = vrot.slane %v329, 1
    %v354 = vrot.slane %v330, 1
    %v355 = vrot.slane %v331, 1
    %v368 = vadd.f32 %v306, %v344
    %v369 = vadd.f32 %v307, %v345
    %v370 = vadd.f32 %v308, %v346
    %v371 = vadd.f32 %v309, %v347
    %v372 = vadd.f32 %v310, %v348
    %v373 = vadd.f32 %v311, %v349
    %v374 = vadd.f32 %v312, %v350
    %v375 = vadd.f32 %v313, %v351
    %v376 = vadd.f32 %v314, %v352
    %v377 = vadd.f32 %v315, %v353
    %v378 = vadd.f32 %v316, %v354
    %v379 = vadd.f32 %v317, %v355
    %s380 = sld [smem:[#allocation3 + $0x4]]
    %v381 = vstv %s380
    %v382 = vmul.f32 %v141, %v381
    %v383 = vmul.f32 %v205, %v381
    %v384 = vmul.f32 %v142, %v381
    %v385 = vmul.f32 %v206, %v381
    %v386 = vmul.f32 %v143, %v381
    %v387 = vmul.f32 %v207, %v381
    %v388 = vmul.f32 %v144, %v381
    %v389 = vmul.f32 %v208, %v381
    %v390 = vmul.f32 %v145, %v381
    %v391 = vmul.f32 %v209, %v381
    %v392 = vmul.f32 %v146, %v381
    %v393 = vmul.f32 %v210, %v381
    %v406 = vrot.slane %v382, 1
    %v407 = vrot.slane %v383, 1
    %v408 = vrot.slane %v384, 1
    %v409 = vrot.slane %v385, 1
    %v410 = vrot.slane %v386, 1
    %v411 = vrot.slane %v387, 1
    %v412 = vrot.slane %v388, 1
    %v413 = vrot.slane %v389, 1
    %v414 = vrot.slane %v390, 1
    %v415 = vrot.slane %v391, 1
    %v416 = vrot.slane %v392, 1
    %v417 = vrot.slane %v393, 1
    %v430 = vadd.f32 %v368, %v406
    %v431 = vadd.f32 %v369, %v407
    %v432 = vadd.f32 %v370, %v408
    %v433 = vadd.f32 %v371, %v409
    %v434 = vadd.f32 %v372, %v410
    %v435 = vadd.f32 %v373, %v411
    %v436 = vadd.f32 %v374, %v412
    %v437 = vadd.f32 %v375, %v413
    %v438 = vadd.f32 %v376, %v414
    %v439 = vadd.f32 %v377, %v415
    %v440 = vadd.f32 %v378, %v416
    %v441 = vadd.f32 %v379, %v417
    %s442 = sld [smem:[#allocation3 + $0x7]]
    %v443 = vstv %s442
    %v444 = vmul.f32 %v142, %v443
    %v445 = vmul.f32 %v206, %v443
    %v446 = vmul.f32 %v143, %v443
    %v447 = vmul.f32 %v207, %v443
    %v448 = vmul.f32 %v144, %v443
    %v449 = vmul.f32 %v208, %v443
    %v450 = vmul.f32 %v145, %v443
    %v451 = vmul.f32 %v209, %v443
    %v452 = vmul.f32 %v146, %v443
    %v453 = vmul.f32 %v210, %v443
    %v454 = vmul.f32 %v147, %v443
    %v455 = vmul.f32 %v211, %v443
    %v468 = vrot.slane %v444, 1
    %v469 = vrot.slane %v445, 1
    %v470 = vrot.slane %v446, 1
    %v471 = vrot.slane %v447, 1
    %v472 = vrot.slane %v448, 1
    %v473 = vrot.slane %v449, 1
    %v474 = vrot.slane %v450, 1
    %v475 = vrot.slane %v451, 1
    %v476 = vrot.slane %v452, 1
    %v477 = vrot.slane %v453, 1
    %v478 = vrot.slane %v454, 1
    %v479 = vrot.slane %v455, 1
    %v492 = vadd.f32 %v430, %v468
    %v493 = vadd.f32 %v431, %v469
    %v494 = vadd.f32 %v432, %v470
    %v495 = vadd.f32 %v433, %v471
    %v496 = vadd.f32 %v434, %v472
    %v497 = vadd.f32 %v435, %v473
    %v498 = vadd.f32 %v436, %v474
    %v499 = vadd.f32 %v437, %v475
    %v500 = vadd.f32 %v438, %v476
    %v501 = vadd.f32 %v439, %v477
    %v502 = vadd.f32 %v440, %v478
    %v503 = vadd.f32 %v441, %v479
    %s504 = sld [smem:[#allocation3 + $0x2]]
    %v505 = vstv %s504
    %v506 = vmul.f32 %v140, %v505
    %v507 = vmul.f32 %v204, %v505
    %v508 = vmul.f32 %v141, %v505
    %v509 = vmul.f32 %v205, %v505
    %v510 = vmul.f32 %v142, %v505
    %v511 = vmul.f32 %v206, %v505
    %v512 = vmul.f32 %v143, %v505
    %v513 = vmul.f32 %v207, %v505
    %v514 = vmul.f32 %v144, %v505
    %v515 = vmul.f32 %v208, %v505
    %v516 = vmul.f32 %v145, %v505
    %v517 = vmul.f32 %v209, %v505
    %v530 = vrot.slane %v506, 2
    %v531 = vrot.slane %v507, 2
    %v532 = vrot.slane %v508, 2
    %v533 = vrot.slane %v509, 2
    %v534 = vrot.slane %v510, 2
    %v535 = vrot.slane %v511, 2
    %v536 = vrot.slane %v512, 2
    %v537 = vrot.slane %v513, 2
    %v538 = vrot.slane %v514, 2
    %v539 = vrot.slane %v515, 2
    %v540 = vrot.slane %v516, 2
    %v541 = vrot.slane %v517, 2
    %v554 = vadd.f32 %v492, %v530
    %v555 = vadd.f32 %v493, %v531
    %v556 = vadd.f32 %v494, %v532
    %v557 = vadd.f32 %v495, %v533
    %v558 = vadd.f32 %v496, %v534
    %v559 = vadd.f32 %v497, %v535
    %v560 = vadd.f32 %v498, %v536
    %v561 = vadd.f32 %v499, %v537
    %v562 = vadd.f32 %v500, %v538
    %v563 = vadd.f32 %v501, %v539
    %v564 = vadd.f32 %v502, %v540
    %v565 = vadd.f32 %v503, %v541
    %s566 = sld [smem:[#allocation3 + $0x5]]
    %v567 = vstv %s566
    %v568 = vmul.f32 %v141, %v567
    %v569 = vmul.f32 %v205, %v567
    %v570 = vmul.f32 %v142, %v567
    %v571 = vmul.f32 %v206, %v567
    %v572 = vmul.f32 %v143, %v567
    %v573 = vmul.f32 %v207, %v567
    %v574 = vmul.f32 %v144, %v567
    %v575 = vmul.f32 %v208, %v567
    %v576 = vmul.f32 %v145, %v567
    %v577 = vmul.f32 %v209, %v567
    %v578 = vmul.f32 %v146, %v567
    %v579 = vmul.f32 %v210, %v567
    %v592 = vrot.slane %v568, 2
    %v593 = vrot.slane %v569, 2
    %v594 = vrot.slane %v570, 2
    %v595 = vrot.slane %v571, 2
    %v596 = vrot.slane %v572, 2
    %v597 = vrot.slane %v573, 2
    %v598 = vrot.slane %v574, 2
    %v599 = vrot.slane %v575, 2
    %v600 = vrot.slane %v576, 2
    %v601 = vrot.slane %v577, 2
    %v602 = vrot.slane %v578, 2
    %v603 = vrot.slane %v579, 2
    %v616 = vadd.f32 %v554, %v592
    %v617 = vadd.f32 %v555, %v593
    %v618 = vadd.f32 %v556, %v594
    %v619 = vadd.f32 %v557, %v595
    %v620 = vadd.f32 %v558, %v596
    %v621 = vadd.f32 %v559, %v597
    %v622 = vadd.f32 %v560, %v598
    %v623 = vadd.f32 %v561, %v599
    %v624 = vadd.f32 %v562, %v600
    %v625 = vadd.f32 %v563, %v601
    %v626 = vadd.f32 %v564, %v602
    %v627 = vadd.f32 %v565, %v603
    %s628 = sld [smem:[#allocation3 + $0x8]]
    %v629 = vstv %s628
    %v630 = vmul.f32 %v142, %v629
    %v631 = vmul.f32 %v206, %v629
    %v632 = vmul.f32 %v143, %v629
    %v633 = vmul.f32 %v207, %v629
    %v634 = vmul.f32 %v144, %v629
    %v635 = vmul.f32 %v208, %v629
    %v636 = vmul.f32 %v145, %v629
    %v637 = vmul.f32 %v209, %v629
    %v638 = vmul.f32 %v146, %v629
    %v639 = vmul.f32 %v210, %v629
    %v640 = vmul.f32 %v147, %v629
    %v641 = vmul.f32 %v211, %v629
    %v654 = vrot.slane %v630, 2
    %v655 = vrot.slane %v631, 2
    %v656 = vrot.slane %v632, 2
    %v657 = vrot.slane %v633, 2
    %v658 = vrot.slane %v634, 2
    %v659 = vrot.slane %v635, 2
    %v660 = vrot.slane %v636, 2
    %v661 = vrot.slane %v637, 2
    %v662 = vrot.slane %v638, 2
    %v663 = vrot.slane %v639, 2
    %v664 = vrot.slane %v640, 2
    %v665 = vrot.slane %v641, 2
    %v678 = vadd.f32 %v616, %v654
    %v679 = vadd.f32 %v617, %v655
    %v680 = vadd.f32 %v618, %v656
    %v681 = vadd.f32 %v619, %v657
    %v682 = vadd.f32 %v620, %v658
    %v683 = vadd.f32 %v621, %v659
    %v684 = vadd.f32 %v622, %v660
    %v685 = vadd.f32 %v623, %v661
    %v686 = vadd.f32 %v624, %v662
    %v687 = vadd.f32 %v625, %v663
    %v688 = vadd.f32 %v626, %v664
    %v689 = vadd.f32 %v627, %v665
    %s690 = sld [smem:[#allocation3 + $0x9]]
    %v691 = vstv %s690
    %v692 = vmul.f32 %v148, %v691
    %v693 = vmul.f32 %v212, %v691
    %v694 = vmul.f32 %v149, %v691
    %v695 = vmul.f32 %v213, %v691
    %v696 = vmul.f32 %v150, %v691
    %v697 = vmul.f32 %v214, %v691
    %v698 = vmul.f32 %v151, %v691
    %v699 = vmul.f32 %v215, %v691
    %v700 = vmul.f32 %v152, %v691
    %v701 = vmul.f32 %v216, %v691
    %v702 = vmul.f32 %v153, %v691
    %v703 = vmul.f32 %v217, %v691
    %v704 = vadd.f32 %v678, %v692
    %v705 = vadd.f32 %v679, %v693
    %v706 = vadd.f32 %v680, %v694
    %v707 = vadd.f32 %v681, %v695
    %v708 = vadd.f32 %v682, %v696
    %v709 = vadd.f32 %v683, %v697
    %v710 = vadd.f32 %v684, %v698
    %v711 = vadd.f32 %v685, %v699
    %v712 = vadd.f32 %v686, %v700
    %v713 = vadd.f32 %v687, %v701
    %v714 = vadd.f32 %v688, %v702
    %v715 = vadd.f32 %v689, %v703
    %s716 = sld [smem:[#allocation3 + $0xc]]
    %v717 = vstv %s716
    %v718 = vmul.f32 %v149, %v717
    %v719 = vmul.f32 %v213, %v717
    %v720 = vmul.f32 %v150, %v717
    %v721 = vmul.f32 %v214, %v717
    %v722 = vmul.f32 %v151, %v717
    %v723 = vmul.f32 %v215, %v717
    %v724 = vmul.f32 %v152, %v717
    %v725 = vmul.f32 %v216, %v717
    %v726 = vmul.f32 %v153, %v717
    %v727 = vmul.f32 %v217, %v717
    %v728 = vmul.f32 %v154, %v717
    %v729 = vmul.f32 %v218, %v717
    %v730 = vadd.f32 %v704, %v718
    %v731 = vadd.f32 %v705, %v719
    %v732 = vadd.f32 %v706, %v720
    %v733 = vadd.f32 %v707, %v721
    %v734 = vadd.f32 %v708, %v722
    %v735 = vadd.f32 %v709, %v723
    %v736 = vadd.f32 %v710, %v724
    %v737 = vadd.f32 %v711, %v725
    %v738 = vadd.f32 %v712, %v726
    %v739 = vadd.f32 %v713, %v727
    %v740 = vadd.f32 %v714, %v728
    %v741 = vadd.f32 %v715, %v729
    %s742 = sld [smem:[#allocation3 + $0xf]]
    %v743 = vstv %s742
    %v744 = vmul.f32 %v150, %v743
    %v745 = vmul.f32 %v214, %v743
    %v746 = vmul.f32 %v151, %v743
    %v747 = vmul.f32 %v215, %v743
    %v748 = vmul.f32 %v152, %v743
    %v749 = vmul.f32 %v216, %v743
    %v750 = vmul.f32 %v153, %v743
    %v751 = vmul.f32 %v217, %v743
    %v752 = vmul.f32 %v154, %v743
    %v753 = vmul.f32 %v218, %v743
    %v754 = vmul.f32 %v155, %v743
    %v755 = vmul.f32 %v219, %v743
    %v756 = vadd.f32 %v730, %v744
    %v757 = vadd.f32 %v731, %v745
    %v758 = vadd.f32 %v732, %v746
    %v759 = vadd.f32 %v733, %v747
    %v760 = vadd.f32 %v734, %v748
    %v761 = vadd.f32 %v735, %v749
    %v762 = vadd.f32 %v736, %v750
    %v763 = vadd.f32 %v737, %v751
    %v764 = vadd.f32 %v738, %v752
    %v765 = vadd.f32 %v739, %v753
    %v766 = vadd.f32 %v740, %v754
    %v767 = vadd.f32 %v741, %v755
    %s768 = sld [smem:[#allocation3 + $0xa]]
    %v769 = vstv %s768
    %v770 = vmul.f32 %v148, %v769
    %v771 = vmul.f32 %v212, %v769
    %v772 = vmul.f32 %v149, %v769
    %v773 = vmul.f32 %v213, %v769
    %v774 = vmul.f32 %v150, %v769
    %v775 = vmul.f32 %v214, %v769
    %v776 = vmul.f32 %v151, %v769
    %v777 = vmul.f32 %v215, %v769
    %v778 = vmul.f32 %v152, %v769
    %v779 = vmul.f32 %v216, %v769
    %v780 = vmul.f32 %v153, %v769
    %v781 = vmul.f32 %v217, %v769
    %v794 = vrot.slane %v770, 1
    %v795 = vrot.slane %v771, 1
    %v796 = vrot.slane %v772, 1
    %v797 = vrot.slane %v773, 1
    %v798 = vrot.slane %v774, 1
    %v799 = vrot.slane %v775, 1
    %v800 = vrot.slane %v776, 1
    %v801 = vrot.slane %v777, 1
    %v802 = vrot.slane %v778, 1
    %v803 = vrot.slane %v779, 1
    %v804 = vrot.slane %v780, 1
    %v805 = vrot.slane %v781, 1
    %v818 = vadd.f32 %v756, %v794
    %v819 = vadd.f32 %v757, %v795
    %v820 = vadd.f32 %v758, %v796
    %v821 = vadd.f32 %v759, %v797
    %v822 = vadd.f32 %v760, %v798
    %v823 = vadd.f32 %v761, %v799
    %v824 = vadd.f32 %v762, %v800
    %v825 = vadd.f32 %v763, %v801
    %v826 = vadd.f32 %v764, %v802
    %v827 = vadd.f32 %v765, %v803
    %v828 = vadd.f32 %v766, %v804
    %v829 = vadd.f32 %v767, %v805
    %s830 = sld [smem:[#allocation3 + $0xd]]
    %v831 = vstv %s830
    %v832 = vmul.f32 %v149, %v831
    %v833 = vmul.f32 %v213, %v831
    %v834 = vmul.f32 %v150, %v831
    %v835 = vmul.f32 %v214, %v831
    %v836 = vmul.f32 %v151, %v831
    %v837 = vmul.f32 %v215, %v831
    %v838 = vmul.f32 %v152, %v831
    %v839 = vmul.f32 %v216, %v831
    %v840 = vmul.f32 %v153, %v831
    %v841 = vmul.f32 %v217, %v831
    %v842 = vmul.f32 %v154, %v831
    %v843 = vmul.f32 %v218, %v831
    %v856 = vrot.slane %v832, 1
    %v857 = vrot.slane %v833, 1
    %v858 = vrot.slane %v834, 1
    %v859 = vrot.slane %v835, 1
    %v860 = vrot.slane %v836, 1
    %v861 = vrot.slane %v837, 1
    %v862 = vrot.slane %v838, 1
    %v863 = vrot.slane %v839, 1
    %v864 = vrot.slane %v840, 1
    %v865 = vrot.slane %v841, 1
    %v866 = vrot.slane %v842, 1
    %v867 = vrot.slane %v843, 1
    %v880 = vadd.f32 %v818, %v856
    %v881 = vadd.f32 %v819, %v857
    %v882 = vadd.f32 %v820, %v858
    %v883 = vadd.f32 %v821, %v859
    %v884 = vadd.f32 %v822, %v860
    %v885 = vadd.f32 %v823, %v861
    %v886 = vadd.f32 %v824, %v862
    %v887 = vadd.f32 %v825, %v863
    %v888 = vadd.f32 %v826, %v864
    %v889 = vadd.f32 %v827, %v865
    %v890 = vadd.f32 %v828, %v866
    %v891 = vadd.f32 %v829, %v867
    %s892 = sld [smem:[#allocation3 + $0x10]]
    %v893 = vstv %s892
    %v894 = vmul.f32 %v150, %v893
    %v895 = vmul.f32 %v214, %v893
    %v896 = vmul.f32 %v151, %v893
    %v897 = vmul.f32 %v215, %v893
    %v898 = vmul.f32 %v152, %v893
    %v899 = vmul.f32 %v216, %v893
    %v900 = vmul.f32 %v153, %v893
    %v901 = vmul.f32 %v217, %v893
    %v902 = vmul.f32 %v154, %v893
    %v903 = vmul.f32 %v218, %v893
    %v904 = vmul.f32 %v155, %v893
    %v905 = vmul.f32 %v219, %v893
    %v918 = vrot.slane %v894, 1
    %v919 = vrot.slane %v895, 1
    %v920 = vrot.slane %v896, 1
    %v921 = vrot.slane %v897, 1
    %v922 = vrot.slane %v898, 1
    %v923 = vrot.slane %v899, 1
    %v924 = vrot.slane %v900, 1
    %v925 = vrot.slane %v901, 1
    %v926 = vrot.slane %v902, 1
    %v927 = vrot.slane %v903, 1
    %v928 = vrot.slane %v904, 1
    %v929 = vrot.slane %v905, 1
    %v942 = vadd.f32 %v880, %v918
    %v943 = vadd.f32 %v881, %v919
    %v944 = vadd.f32 %v882, %v920
    %v945 = vadd.f32 %v883, %v921
    %v946 = vadd.f32 %v884, %v922
    %v947 = vadd.f32 %v885, %v923
    %v948 = vadd.f32 %v886, %v924
    %v949 = vadd.f32 %v887, %v925
    %v950 = vadd.f32 %v888, %v926
    %v951 = vadd.f32 %v889, %v927
    %v952 = vadd.f32 %v890, %v928
    %v953 = vadd.f32 %v891, %v929
    %s954 = sld [smem:[#allocation3 + $0xb]]
    %v955 = vstv %s954
    %v956 = vmul.f32 %v148, %v955
    %v957 = vmul.f32 %v212, %v955
    %v958 = vmul.f32 %v149, %v955
    %v959 = vmul.f32 %v213, %v955
    %v960 = vmul.f32 %v150, %v955
    %v961 = vmul.f32 %v214, %v955
    %v962 = vmul.f32 %v151, %v955
    %v963 = vmul.f32 %v215, %v955
    %v964 = vmul.f32 %v152, %v955
    %v965 = vmul.f32 %v216, %v955
    %v966 = vmul.f32 %v153, %v955
    %v967 = vmul.f32 %v217, %v955
    %v980 = vrot.slane %v956, 2
    %v981 = vrot.slane %v957, 2
    %v982 = vrot.slane %v958, 2
    %v983 = vrot.slane %v959, 2
    %v984 = vrot.slane %v960, 2
    %v985 = vrot.slane %v961, 2
    %v986 = vrot.slane %v962, 2
    %v987 = vrot.slane %v963, 2
    %v988 = vrot.slane %v964, 2
    %v989 = vrot.slane %v965, 2
    %v990 = vrot.slane %v966, 2
    %v991 = vrot.slane %v967, 2
    %v1004 = vadd.f32 %v942, %v980
    %v1005 = vadd.f32 %v943, %v981
    %v1006 = vadd.f32 %v944, %v982
    %v1007 = vadd.f32 %v945, %v983
    %v1008 = vadd.f32 %v946, %v984
    %v1009 = vadd.f32 %v947, %v985
    %v1010 = vadd.f32 %v948, %v986
    %v1011 = vadd.f32 %v949, %v987
    %v1012 = vadd.f32 %v950, %v988
    %v1013 = vadd.f32 %v951, %v989
    %v1014 = vadd.f32 %v952, %v990
    %v1015 = vadd.f32 %v953, %v991
    %s1016 = sld [smem:[#allocation3 + $0xe]]
    %v1017 = vstv %s1016
    %v1018 = vmul.f32 %v149, %v1017
    %v1019 = vmul.f32 %v213, %v1017
    %v1020 = vmul.f32 %v150, %v1017
    %v1021 = vmul.f32 %v214, %v1017
    %v1022 = vmul.f32 %v151, %v1017
    %v1023 = vmul.f32 %v215, %v1017
    %v1024 = vmul.f32 %v152, %v1017
    %v1025 = vmul.f32 %v216, %v1017
    %v1026 = vmul.f32 %v153, %v1017
    %v1027 = vmul.f32 %v217, %v1017
    %v1028 = vmul.f32 %v154, %v1017
    %v1029 = vmul.f32 %v218, %v1017
    %v1042 = vrot.slane %v1018, 2
    %v1043 = vrot.slane %v1019, 2
    %v1044 = vrot.slane %v1020, 2
    %v1045 = vrot.slane %v1021, 2
    %v1046 = vrot.slane %v1022, 2
    %v1047 = vrot.slane %v1023, 2
    %v1048 = vrot.slane %v1024, 2
    %v1049 = vrot.slane %v1025, 2
    %v1050 = vrot.slane %v1026, 2
    %v1051 = vrot.slane %v1027, 2
    %v1052 = vrot.slane %v1028, 2
    %v1053 = vrot.slane %v1029, 2
    %v1066 = vadd.f32 %v1004, %v1042
    %v1067 = vadd.f32 %v1005, %v1043
    %v1068 = vadd.f32 %v1006, %v1044
    %v1069 = vadd.f32 %v1007, %v1045
    %v1070 = vadd.f32 %v1008, %v1046
    %v1071 = vadd.f32 %v1009, %v1047
    %v1072 = vadd.f32 %v1010, %v1048
    %v1073 = vadd.f32 %v1011, %v1049
    %v1074 = vadd.f32 %v1012, %v1050
    %v1075 = vadd.f32 %v1013, %v1051
    %v1076 = vadd.f32 %v1014, %v1052
    %v1077 = vadd.f32 %v1015, %v1053
    %s1078 = sld [smem:[#allocation3 + $0x11]]
    %v1079 = vstv %s1078
    %v1080 = vmul.f32 %v150, %v1079
    %v1081 = vmul.f32 %v214, %v1079
    %v1082 = vmul.f32 %v151, %v1079
    %v1083 = vmul.f32 %v215, %v1079
    %v1084 = vmul.f32 %v152, %v1079
    %v1085 = vmul.f32 %v216, %v1079
    %v1086 = vmul.f32 %v153, %v1079
    %v1087 = vmul.f32 %v217, %v1079
    %v1088 = vmul.f32 %v154, %v1079
    %v1089 = vmul.f32 %v218, %v1079
    %v1090 = vmul.f32 %v155, %v1079
    %v1091 = vmul.f32 %v219, %v1079
    %v1104 = vrot.slane %v1080, 2
    %v1105 = vrot.slane %v1081, 2
    %v1106 = vrot.slane %v1082, 2
    %v1107 = vrot.slane %v1083, 2
    %v1108 = vrot.slane %v1084, 2
    %v1109 = vrot.slane %v1085, 2
    %v1110 = vrot.slane %v1086, 2
    %v1111 = vrot.slane %v1087, 2
    %v1112 = vrot.slane %v1088, 2
    %v1113 = vrot.slane %v1089, 2
    %v1114 = vrot.slane %v1090, 2
    %v1115 = vrot.slane %v1091, 2
    %v1128 = vadd.f32 %v1066, %v1104
    %v1129 = vadd.f32 %v1067, %v1105
    %v1130 = vadd.f32 %v1068, %v1106
    %v1131 = vadd.f32 %v1069, %v1107
    %v1132 = vadd.f32 %v1070, %v1108
    %v1133 = vadd.f32 %v1071, %v1109
    %v1134 = vadd.f32 %v1072, %v1110
    %v1135 = vadd.f32 %v1073, %v1111
    %v1136 = vadd.f32 %v1074, %v1112
    %v1137 = vadd.f32 %v1075, %v1113
    %v1138 = vadd.f32 %v1076, %v1114
    %v1139 = vadd.f32 %v1077, %v1115
    %s1140 = sld [smem:[#allocation3 + $0x12]]
    %v1141 = vstv %s1140
    %v1142 = vmul.f32 %v172, %v1141
    %v1143 = vmul.f32 %v236, %v1141
    %v1144 = vmul.f32 %v173, %v1141
    %v1145 = vmul.f32 %v237, %v1141
    %v1146 = vmul.f32 %v174, %v1141
    %v1147 = vmul.f32 %v238, %v1141
    %v1148 = vmul.f32 %v175, %v1141
    %v1149 = vmul.f32 %v239, %v1141
    %v1150 = vmul.f32 %v176, %v1141
    %v1151 = vmul.f32 %v240, %v1141
    %v1152 = vmul.f32 %v177, %v1141
    %v1153 = vmul.f32 %v241, %v1141
    %v1154 = vadd.f32 %v1128, %v1142
    %v1155 = vadd.f32 %v1129, %v1143
    %v1156 = vadd.f32 %v1130, %v1144
    %v1157 = vadd.f32 %v1131, %v1145
    %v1158 = vadd.f32 %v1132, %v1146
    %v1159 = vadd.f32 %v1133, %v1147
    %v1160 = vadd.f32 %v1134, %v1148
    %v1161 = vadd.f32 %v1135, %v1149
    %v1162 = vadd.f32 %v1136, %v1150
    %v1163 = vadd.f32 %v1137, %v1151
    %v1164 = vadd.f32 %v1138, %v1152
    %v1165 = vadd.f32 %v1139, %v1153
    %s1166 = sld [smem:[#allocation3 + $0x15]]
    %v1167 = vstv %s1166
    %v1168 = vmul.f32 %v173, %v1167
    %v1169 = vmul.f32 %v237, %v1167
    %v1170 = vmul.f32 %v174, %v1167
    %v1171 = vmul.f32 %v238, %v1167
    %v1172 = vmul.f32 %v175, %v1167
    %v1173 = vmul.f32 %v239, %v1167
    %v1174 = vmul.f32 %v176, %v1167
    %v1175 = vmul.f32 %v240, %v1167
    %v1176 = vmul.f32 %v177, %v1167
    %v1177 = vmul.f32 %v241, %v1167
    %v1178 = vmul.f32 %v178, %v1167
    %v1179 = vmul.f32 %v242, %v1167
    %v1180 = vadd.f32 %v1154, %v1168
    %v1181 = vadd.f32 %v1155, %v1169
    %v1182 = vadd.f32 %v1156, %v1170
    %v1183 = vadd.f32 %v1157, %v1171
    %v1184 = vadd.f32 %v1158, %v1172
    %v1185 = vadd.f32 %v1159, %v1173
    %v1186 = vadd.f32 %v1160, %v1174
    %v1187 = vadd.f32 %v1161, %v1175
    %v1188 = vadd.f32 %v1162, %v1176
    %v1189 = vadd.f32 %v1163, %v1177
    %v1190 = vadd.f32 %v1164, %v1178
    %v1191 = vadd.f32 %v1165, %v1179
    %s1192 = sld [smem:[#allocation3 + $0x18]]
    %v1193 = vstv %s1192
    %v1194 = vmul.f32 %v174, %v1193
    %v1195 = vmul.f32 %v238, %v1193
    %v1196 = vmul.f32 %v175, %v1193
    %v1197 = vmul.f32 %v239, %v1193
    %v1198 = vmul.f32 %v176, %v1193
    %v1199 = vmul.f32 %v240, %v1193
    %v1200 = vmul.f32 %v177, %v1193
    %v1201 = vmul.f32 %v241, %v1193
    %v1202 = vmul.f32 %v178, %v1193
    %v1203 = vmul.f32 %v242, %v1193
    %v1204 = vmul.f32 %v179, %v1193
    %v1205 = vmul.f32 %v243, %v1193
    %v1206 = vadd.f32 %v1180, %v1194
    %v1207 = vadd.f32 %v1181, %v1195
    %v1208 = vadd.f32 %v1182, %v1196
    %v1209 = vadd.f32 %v1183, %v1197
    %v1210 = vadd.f32 %v1184, %v1198
    %v1211 = vadd.f32 %v1185, %v1199
    %v1212 = vadd.f32 %v1186, %v1200
    %v1213 = vadd.f32 %v1187, %v1201
    %v1214 = vadd.f32 %v1188, %v1202
    %v1215 = vadd.f32 %v1189, %v1203
    %v1216 = vadd.f32 %v1190, %v1204
    %v1217 = vadd.f32 %v1191, %v1205
    %s1218 = sld [smem:[#allocation3 + $0x13]]
    %v1219 = vstv %s1218
    %v1220 = vmul.f32 %v172, %v1219
    %v1221 = vmul.f32 %v236, %v1219
    %v1222 = vmul.f32 %v173, %v1219
    %v1223 = vmul.f32 %v237, %v1219
    %v1224 = vmul.f32 %v174, %v1219
    %v1225 = vmul.f32 %v238, %v1219
    %v1226 = vmul.f32 %v175, %v1219
    %v1227 = vmul.f32 %v239, %v1219
    %v1228 = vmul.f32 %v176, %v1219
    %v1229 = vmul.f32 %v240, %v1219
    %v1230 = vmul.f32 %v177, %v1219
    %v1231 = vmul.f32 %v241, %v1219
    %v1244 = vrot.slane %v1220, 1
    %v1245 = vrot.slane %v1221, 1
    %v1246 = vrot.slane %v1222, 1
    %v1247 = vrot.slane %v1223, 1
    %v1248 = vrot.slane %v1224, 1
    %v1249 = vrot.slane %v1225, 1
    %v1250 = vrot.slane %v1226, 1
    %v1251 = vrot.slane %v1227, 1
    %v1252 = vrot.slane %v1228, 1
    %v1253 = vrot.slane %v1229, 1
    %v1254 = vrot.slane %v1230, 1
    %v1255 = vrot.slane %v1231, 1
    %v1268 = vadd.f32 %v1206, %v1244
    %v1269 = vadd.f32 %v1207, %v1245
    %v1270 = vadd.f32 %v1208, %v1246
    %v1271 = vadd.f32 %v1209, %v1247
    %v1272 = vadd.f32 %v1210, %v1248
    %v1273 = vadd.f32 %v1211, %v1249
    %v1274 = vadd.f32 %v1212, %v1250
    %v1275 = vadd.f32 %v1213, %v1251
    %v1276 = vadd.f32 %v1214, %v1252
    %v1277 = vadd.f32 %v1215, %v1253
    %v1278 = vadd.f32 %v1216, %v1254
    %v1279 = vadd.f32 %v1217, %v1255
    %s1280 = sld [smem:[#allocation3 + $0x16]]
    %v1281 = vstv %s1280
    %v1282 = vmul.f32 %v173, %v1281
    %v1283 = vmul.f32 %v237, %v1281
    %v1284 = vmul.f32 %v174, %v1281
    %v1285 = vmul.f32 %v238, %v1281
    %v1286 = vmul.f32 %v175, %v1281
    %v1287 = vmul.f32 %v239, %v1281
    %v1288 = vmul.f32 %v176, %v1281
    %v1289 = vmul.f32 %v240, %v1281
    %v1290 = vmul.f32 %v177, %v1281
    %v1291 = vmul.f32 %v241, %v1281
    %v1292 = vmul.f32 %v178, %v1281
    %v1293 = vmul.f32 %v242, %v1281
    %v1306 = vrot.slane %v1282, 1
    %v1307 = vrot.slane %v1283, 1
    %v1308 = vrot.slane %v1284, 1
    %v1309 = vrot.slane %v1285, 1
    %v1310 = vrot.slane %v1286, 1
    %v1311 = vrot.slane %v1287, 1
    %v1312 = vrot.slane %v1288, 1
    %v1313 = vrot.slane %v1289, 1
    %v1314 = vrot.slane %v1290, 1
    %v1315 = vrot.slane %v1291, 1
    %v1316 = vrot.slane %v1292, 1
    %v1317 = vrot.slane %v1293, 1
    %v1330 = vadd.f32 %v1268, %v1306
    %v1331 = vadd.f32 %v1269, %v1307
    %v1332 = vadd.f32 %v1270, %v1308
    %v1333 = vadd.f32 %v1271, %v1309
    %v1334 = vadd.f32 %v1272, %v1310
    %v1335 = vadd.f32 %v1273, %v1311
    %v1336 = vadd.f32 %v1274, %v1312
    %v1337 = vadd.f32 %v1275, %v1313
    %v1338 = vadd.f32 %v1276, %v1314
    %v1339 = vadd.f32 %v1277, %v1315
    %v1340 = vadd.f32 %v1278, %v1316
    %v1341 = vadd.f32 %v1279, %v1317
    %s1342 = sld [smem:[#allocation3 + $0x19]]
    %v1343 = vstv %s1342
    %v1344 = vmul.f32 %v174, %v1343
    %v1345 = vmul.f32 %v238, %v1343
    %v1346 = vmul.f32 %v175, %v1343
    %v1347 = vmul.f32 %v239, %v1343
    %v1348 = vmul.f32 %v176, %v1343
    %v1349 = vmul.f32 %v240, %v1343
    %v1350 = vmul.f32 %v177, %v1343
    %v1351 = vmul.f32 %v241, %v1343
    %v1352 = vmul.f32 %v178, %v1343
    %v1353 = vmul.f32 %v242, %v1343
    %v1354 = vmul.f32 %v179, %v1343
    %v1355 = vmul.f32 %v243, %v1343
    %v1368 = vrot.slane %v1344, 1
    %v1369 = vrot.slane %v1345, 1
    %v1370 = vrot.slane %v1346, 1
    %v1371 = vrot.slane %v1347, 1
    %v1372 = vrot.slane %v1348, 1
    %v1373 = vrot.slane %v1349, 1
    %v1374 = vrot.slane %v1350, 1
    %v1375 = vrot.slane %v1351, 1
    %v1376 = vrot.slane %v1352, 1
    %v1377 = vrot.slane %v1353, 1
    %v1378 = vrot.slane %v1354, 1
    %v1379 = vrot.slane %v1355, 1
    %v1392 = vadd.f32 %v1330, %v1368
    %v1393 = vadd.f32 %v1331, %v1369
    %v1394 = vadd.f32 %v1332, %v1370
    %v1395 = vadd.f32 %v1333, %v1371
    %v1396 = vadd.f32 %v1334, %v1372
    %v1397 = vadd.f32 %v1335, %v1373
    %v1398 = vadd.f32 %v1336, %v1374
    %v1399 = vadd.f32 %v1337, %v1375
    %v1400 = vadd.f32 %v1338, %v1376
    %v1401 = vadd.f32 %v1339, %v1377
    %v1402 = vadd.f32 %v1340, %v1378
    %v1403 = vadd.f32 %v1341, %v1379
    %s1404 = sld [smem:[#allocation3 + $0x14]]
    %v1405 = vstv %s1404
    %v1406 = vmul.f32 %v172, %v1405
    %v1407 = vmul.f32 %v236, %v1405
    %v1408 = vmul.f32 %v173, %v1405
    %v1409 = vmul.f32 %v237, %v1405
    %v1410 = vmul.f32 %v174, %v1405
    %v1411 = vmul.f32 %v238, %v1405
    %v1412 = vmul.f32 %v175, %v1405
    %v1413 = vmul.f32 %v239, %v1405
    %v1414 = vmul.f32 %v176, %v1405
    %v1415 = vmul.f32 %v240, %v1405
    %v1416 = vmul.f32 %v177, %v1405
    %v1417 = vmul.f32 %v241, %v1405
    %v1430 = vrot.slane %v1406, 2
    %v1431 = vrot.slane %v1407, 2
    %v1432 = vrot.slane %v1408, 2
    %v1433 = vrot.slane %v1409, 2
    %v1434 = vrot.slane %v1410, 2
    %v1435 = vrot.slane %v1411, 2
    %v1436 = vrot.slane %v1412, 2
    %v1437 = vrot.slane %v1413, 2
    %v1438 = vrot.slane %v1414, 2
    %v1439 = vrot.slane %v1415, 2
    %v1440 = vrot.slane %v1416, 2
    %v1441 = vrot.slane %v1417, 2
    %v1454 = vadd.f32 %v1392, %v1430
    %v1455 = vadd.f32 %v1393, %v1431
    %v1456 = vadd.f32 %v1394, %v1432
    %v1457 = vadd.f32 %v1395, %v1433
    %v1458 = vadd.f32 %v1396, %v1434
    %v1459 = vadd.f32 %v1397, %v1435
    %v1460 = vadd.f32 %v1398, %v1436
    %v1461 = vadd.f32 %v1399, %v1437
    %v1462 = vadd.f32 %v1400, %v1438
    %v1463 = vadd.f32 %v1401, %v1439
    %v1464 = vadd.f32 %v1402, %v1440
    %v1465 = vadd.f32 %v1403, %v1441
    %s1466 = sld [smem:[#allocation3 + $0x17]]
    %v1467 = vstv %s1466
    %v1468 = vmul.f32 %v173, %v1467
    %v1469 = vmul.f32 %v237, %v1467
    %v1470 = vmul.f32 %v174, %v1467
    %v1471 = vmul.f32 %v238, %v1467
    %v1472 = vmul.f32 %v175, %v1467
    %v1473 = vmul.f32 %v239, %v1467
    %v1474 = vmul.f32 %v176, %v1467
    %v1475 = vmul.f32 %v240, %v1467
    %v1476 = vmul.f32 %v177, %v1467
    %v1477 = vmul.f32 %v241, %v1467
    %v1478 = vmul.f32 %v178, %v1467
    %v1479 = vmul.f32 %v242, %v1467
    %v1492 = vrot.slane %v1468, 2
    %v1493 = vrot.slane %v1469, 2
    %v1494 = vrot.slane %v1470, 2
    %v1495 = vrot.slane %v1471, 2
    %v1496 = vrot.slane %v1472, 2
    %v1497 = vrot.slane %v1473, 2
    %v1498 = vrot.slane %v1474, 2
    %v1499 = vrot.slane %v1475, 2
    %v1500 = vrot.slane %v1476, 2
    %v1501 = vrot.slane %v1477, 2
    %v1502 = vrot.slane %v1478, 2
    %v1503 = vrot.slane %v1479, 2
    %v1516 = vadd.f32 %v1454, %v1492
    %v1517 = vadd.f32 %v1455, %v1493
    %v1518 = vadd.f32 %v1456, %v1494
    %v1519 = vadd.f32 %v1457, %v1495
    %v1520 = vadd.f32 %v1458, %v1496
    %v1521 = vadd.f32 %v1459, %v1497
    %v1522 = vadd.f32 %v1460, %v1498
    %v1523 = vadd.f32 %v1461, %v1499
    %v1524 = vadd.f32 %v1462, %v1500
    %v1525 = vadd.f32 %v1463, %v1501
    %v1526 = vadd.f32 %v1464, %v1502
    %v1527 = vadd.f32 %v1465, %v1503
    %s1528 = sld [smem:[#allocation3 + $0x1a]]
    %v1529 = vstv %s1528
    %v1530 = vmul.f32 %v174, %v1529
    %v1531 = vmul.f32 %v238, %v1529
    %v1532 = vmul.f32 %v175, %v1529
    %v1533 = vmul.f32 %v239, %v1529
    %v1534 = vmul.f32 %v176, %v1529
    %v1535 = vmul.f32 %v240, %v1529
    %v1536 = vmul.f32 %v177, %v1529
    %v1537 = vmul.f32 %v241, %v1529
    %v1538 = vmul.f32 %v178, %v1529
    %v1539 = vmul.f32 %v242, %v1529
    %v1540 = vmul.f32 %v179, %v1529
    %v1541 = vmul.f32 %v243, %v1529
    %v1554 = vrot.slane %v1530, 2
    %v1555 = vrot.slane %v1531, 2
    %v1556 = vrot.slane %v1532, 2
    %v1557 = vrot.slane %v1533, 2
    %v1558 = vrot.slane %v1534, 2
    %v1559 = vrot.slane %v1535, 2
    %v1560 = vrot.slane %v1536, 2
    %v1561 = vrot.slane %v1537, 2
    %v1562 = vrot.slane %v1538, 2
    %v1563 = vrot.slane %v1539, 2
    %v1564 = vrot.slane %v1540, 2
    %v1565 = vrot.slane %v1541, 2
    %v1578 = vadd.f32 %v1516, %v1554
    %v1579 = vadd.f32 %v1517, %v1555
    %v1580 = vadd.f32 %v1518, %v1556
    %v1581 = vadd.f32 %v1519, %v1557
    %v1582 = vadd.f32 %v1520, %v1558
    %v1583 = vadd.f32 %v1521, %v1559
    %v1584 = vadd.f32 %v1522, %v1560
    %v1585 = vadd.f32 %v1523, %v1561
    %v1586 = vadd.f32 %v1524, %v1562
    %v1587 = vadd.f32 %v1525, %v1563
    %v1588 = vadd.f32 %v1526, %v1564
    %v1589 = vadd.f32 %v1527, %v1565
    %v1590 = vmax.f32 %v1578, %v1580
    %v1591 = vmax.f32 %v1579, %v1581
    %v1592 = vmax.f32 %v1582, %v1584
    %v1593 = vmax.f32 %v1583, %v1585
    %v1594 = vmax.f32 %v1586, %v1588
    %v1595 = vmax.f32 %v1587, %v1589
    %v1598 = vrot.slane %v1590, 1
    %v1599 = vrot.slane %v1591, 1
    %v1602 = vmax.f32 %v1590, %v1598
    %v1603 = vmax.f32 %v1591, %v1599
    %s1604 = sld [smem:[#allocation2]]
    %v1605 = vstv %s1604
    %v1606 = vadd.f32 %v1602, %v1605
    %v1607 = vadd.f32 %v1603, %v1605
    %v1608 = vmax.f32 %v1606, 0.0
    %v1609 = vmax.f32 %v1607, 0.0
    %s1610 = sld [smem:[#allocation5]]
    %v1611 = vstv %s1610
    %v1612 = vmul.f32 %v1608, %v1611
    %v1613 = vmul.f32 %v1609, %v1611
    %s1614 = sld [smem:[#allocation5 + $0x1]]
    %v1615 = vstv %s1614
    %v1616 = vmul.f32 %v1608, %v1615
    %v1617 = vmul.f32 %v1609, %v1615
    %s1618 = sld [smem:[#allocation5 + $0x2]]
    %v1619 = vstv %s1618
    %v1620 = vmul.f32 %v1608, %v1619
    %v1621 = vmul.f32 %v1609, %v1619
    %s1622 = sld [smem:[#allocation5 + $0x3]]
    %v1623 = vstv %s1622
    %v1624 = vmul.f32 %v1608, %v1623
    %v1625 = vmul.f32 %v1609, %v1623
    %v1628 = vrot.slane %v1620, 2
    %v1629 = vrot.slane %v1621, 2
    %v1632 = vadd.f32 %v1612, %v1628
    %v1633 = vadd.f32 %v1613, %v1629
    %v1636 = vrot.slane %v1624, 2
    %v1637 = vrot.slane %v1625, 2
    %v1640 = vadd.f32 %v1616, %v1636
    %v1641 = vadd.f32 %v1617, %v1637
    %s1642 = sld [smem:[#allocation5 + $0x4]]
    %v1643 = vstv %s1642
    %v1644 = vmul.f32 %v1608, %v1643
    %v1645 = vmul.f32 %v1609, %v1643
    %s1646 = sld [smem:[#allocation5 + $0x5]]
    %v1647 = vstv %s1646
    %v1648 = vmul.f32 %v1608, %v1647
    %v1649 = vmul.f32 %v1609, %v1647
    %v1652 = vrot.slane %v1644, 4
    %v1653 = vrot.slane %v1645, 4
    %v1656 = vadd.f32 %v1632, %v1652
    %v1657 = vadd.f32 %v1633, %v1653
    %v1660 = vrot.slane %v1648, 4
    %v1661 = vrot.slane %v1649, 4
    %v1664 = vadd.f32 %v1640, %v1660
    %v1665 = vadd.f32 %v1641, %v1661
    %v1668 = vrot.slane %v1592, 1
    %v1669 = vrot.slane %v1593, 1
    %v1672 = vmax.f32 %v1592, %v1668
    %v1673 = vmax.f32 %v1593, %v1669
    %v1674 = vadd.f32 %v1672, %v1605
    %v1675 = vadd.f32 %v1673, %v1605
    %v1676 = vmax.f32 %v1674, 0.0
    %v1677 = vmax.f32 %v1675, 0.0
    %s1678 = sld [smem:[#allocation5 + $0x6]]
    %v1679 = vstv %s1678
    %v1680 = vmul.f32 %v1676, %v1679
    %v1681 = vmul.f32 %v1677, %v1679
    %s1682 = sld [smem:[#allocation5 + $0x7]]
    %v1683 = vstv %s1682
    %v1684 = vmul.f32 %v1676, %v1683
    %v1685 = vmul.f32 %v1677, %v1683
    %v1686 = vadd.f32 %v1656, %v1680
    %v1687 = vadd.f32 %v1657, %v1681
    %v1688 = vadd.f32 %v1664, %v1684
    %v1689 = vadd.f32 %v1665, %v1685
    %s1690 = sld [smem:[#allocation5 + $0x8]]
    %v1691 = vstv %s1690
    %v1692 = vmul.f32 %v1676, %v1691
    %v1693 = vmul.f32 %v1677, %v1691
    %s1694 = sld [smem:[#allocation5 + $0x9]]
    %v1695 = vstv %s1694
    %v1696 = vmul.f32 %v1676, %v1695
    %v1697 = vmul.f32 %v1677, %v1695
    %v1700 = vrot.slane %v1692, 2
    %v1701 = vrot.slane %v1693, 2
    %v1704 = vadd.f32 %v1686, %v1700
    %v1705 = vadd.f32 %v1687, %v1701
    %v1708 = vrot.slane %v1696, 2
    %v1709 = vrot.slane %v1697, 2
    %v1712 = vadd.f32 %v1688, %v1708
    %v1713 = vadd.f32 %v1689, %v1709
    %s1714 = sld [smem:[#allocation5 + $0xa]]
    %v1715 = vstv %s1714
    %v1716 = vmul.f32 %v1676, %v1715
    %v1717 = vmul.f32 %v1677, %v1715
    %s1718 = sld [smem:[#allocation5 + $0xb]]
    %v1719 = vstv %s1718
    %v1720 = vmul.f32 %v1676, %v1719
    %v1721 = vmul.f32 %v1677, %v1719
    %v1724 = vrot.slane %v1716, 4
    %v1725 = vrot.slane %v1717, 4
    %v1728 = vadd.f32 %v1704, %v1724
    %v1729 = vadd.f32 %v1705, %v1725
    %v1732 = vrot.slane %v1720, 4
    %v1733 = vrot.slane %v1721, 4
    %v1736 = vadd.f32 %v1712, %v1732
    %v1737 = vadd.f32 %v1713, %v1733
    %v1740 = vrot.slane %v1594, 1
    %v1741 = vrot.slane %v1595, 1
    %v1744 = vmax.f32 %v1594, %v1740
    %v1745 = vmax.f32 %v1595, %v1741
    %v1746 = vadd.f32 %v1744, %v1605
    %v1747 = vadd.f32 %v1745, %v1605
    %v1748 = vmax.f32 %v1746, 0.0
    %v1749 = vmax.f32 %v1747, 0.0
    %s1750 = sld [smem:[#allocation5 + $0xc]]
    %v1751 = vstv %s1750
    %v1752 = vmul.f32 %v1748, %v1751
    %v1753 = vmul.f32 %v1749, %v1751
    %s1754 = sld [smem:[#allocation5 + $0xd]]
    %v1755 = vstv %s1754
    %v1756 = vmul.f32 %v1748, %v1755
    %v1757 = vmul.f32 %v1749, %v1755
    %v1758 = vadd.f32 %v1728, %v1752
    %v1759 = vadd.f32 %v1729, %v1753
    %v1760 = vadd.f32 %v1736, %v1756
    %v1761 = vadd.f32 %v1737, %v1757
    %s1762 = sld [smem:[#allocation5 + $0xe]]
    %v1763 = vstv %s1762
    %v1764 = vmul.f32 %v1748, %v1763
    %v1765 = vmul.f32 %v1749, %v1763
    %s1766 = sld [smem:[#allocation5 + $0xf]]
    %v1767 = vstv %s1766
    %v1768 = vmul.f32 %v1748, %v1767
    %v1769 = vmul.f32 %v1749, %v1767
    %v1772 = vrot.slane %v1764, 2
    %v1773 = vrot.slane %v1765, 2
    %v1776 = vadd.f32 %v1758, %v1772
    %v1777 = vadd.f32 %v1759, %v1773
    %v1780 = vrot.slane %v1768, 2
    %v1781 = vrot.slane %v1769, 2
    %v1784 = vadd.f32 %v1760, %v1780
    %v1785 = vadd.f32 %v1761, %v1781
    %s1786 = sld [smem:[#allocation5 + $0x10]]
    %v1787 = vstv %s1786
    %v1788 = vmul.f32 %v1748, %v1787
    %v1789 = vmul.f32 %v1749, %v1787
    %s1790 = sld [smem:[#allocation5 + $0x11]]
    %v1791 = vstv %s1790
    %v1792 = vmul.f32 %v1748, %v1791
    %v1793 = vmul.f32 %v1749, %v1791
    %v1796 = vrot.slane %v1788, 4
    %v1797 = vrot.slane %v1789, 4
    %v1800 = vadd.f32 %v1776, %v1796
    %v1801 = vadd.f32 %v1777, %v1797
    %v1804 = vrot.slane %v1792, 4
    %v1805 = vrot.slane %v1793, 4
    %v1808 = vadd.f32 %v1784, %v1804
    %v1809 = vadd.f32 %v1785, %v1805
    %s1810 = sld [smem:[#allocation7]]
    %v1811 = vstv %s1810
    %v1812 = vadd.f32 %v1800, %v1811
    %v1813 = vadd.f32 %v1801, %v1811
    %v1814 = vmax.f32 %v1812, 0.0
    %v1815 = vmax.f32 %v1813, 0.0
    %s1816 = sld [smem:[#allocation7 + $0x1]]
    %v1817 = vstv %s1816
    %v1818 = vadd.f32 %v1808, %v1817
    %v1819 = vadd.f32 %v1809, %v1817
    %v1820 = vmax.f32 %v1818, 0.0
    %v1821 = vmax.f32 %v1819, 0.0
    %v1824 = vrot.slane %v1820, 7
    %v1825 = vrot.slane %v1821, 7
    %vm1828 = vcmask 1040384
    %v1829 = vsel %vm1828, %v1814, %v1824
    %v1830 = vsel %vm1828, %v1815, %v1825
    %v1833 = vcombine.low %v1829, %v1830
    %v1835 = vunpack.c.l.s4 1983009808
    %v1836 = vunpack.c.0.s8 %v1835
    %v1837 = vlaneseq
    %v1838 = vshrl.u32 %v1837, 7
    %v1839 = vsub.s32 %v1836, %v1838
    %v1840 = vrot.slane %v1833, %v1839
    %1842 = vst [vmem:[%s5] sm:$0xf] %v1840
    // Predicated region
    $region34: #{net_forward.1} parent=1 // pred_check
      _
    $region35: #{net_forward.1} parent=1 // pred_check_branch
      %1844 = sbr.rel (0) target = $region37
    $region36: #{net_forward.1} parent=1 // pred_region
      _
    $region37: #{net_forward.1} parent=1 // pred_fallthru
      _
    // Predicated region
    $region38: #{net_forward.1} parent=1 // pred_check
      _
    $region39: #{net_forward.1} parent=1 // pred_check_branch
      %1846 = sbr.rel (0) target = $region41
    $region40: #{net_forward.1} parent=1 // pred_region
      _
    $region41: #{net_forward.1} parent=1 // pred_fallthru
      _
    %1847 = vsyncpa [#allocation4], 1
    %1848 = vsyncpa [#allocation6], 1

</llo_original>
